<compile_context>
chip_gen: v6e
topology: v6e:2x2x1
jax: 0.10.0
libtpu: 0.0.40
codegen_flags: <defaults>
</compile_context>

<pallas_src>
import functools

import jax
import jax.numpy as jnp
from jax.experimental import pallas as pl
from jax.experimental.pallas import tpu as pltpu


_LANE_TILE_CAP = 2048   # max H*W tile on the streamed (lane) axis of Pass A


def _round_up(x, m):
    return ((x + m - 1) // m) * m


def _largest_aligned_divisor(dim, align, cap):
    """Largest multiple of `align` dividing `dim` and <= cap; None if none exists."""
    best = None
    d = align
    lim = min(dim, cap)
    while d <= lim:
        if dim % d == 0:
            best = d
        d += align
    return best


def _chip_budgets():
    """Returns (streaming-block byte target, vmem_limit_bytes) per TPU generation."""
    phys = None
    try:
        info = pltpu.get_tpu_info()
        for attr in ("vmem_capacity_bytes", "vmem_size_bytes", "vmem_bytes"):
            v = getattr(info, attr, None)
            if v:
                phys = int(v)
                break
    except Exception:
        phys = None
    if phys is not None and phys >= 100 * (1 << 20):
        # v5e / v6e: 128 MiB physical VMEM -> larger blocks amortize per-step cost.
        return 16 * (1 << 20), 64 * (1 << 20)
    # v7x (64 MiB physical VMEM) or unknown chip: conservative budget with headroom.
    return 8 * (1 << 20), 48 * (1 << 20)


def _pool_mean_kernel(x_ref, out_ref, *, inv_hw):
    """Pass A. grid = (C_tiles, HW_tiles); HW innermost ("arbitrary").

    x_ref:   (N, tile_c, tile_hw)  NCHW slab (C on sublanes, HW on lanes)
    out_ref: (N, tile_c) f32       spatial mean of this C block; the block is
                                   resident across the HW axis and doubles as
                                   the f32 accumulator.
    """
    hi = pl.program_id(1)

    @pl.when(hi == 0)
    def _():
        out_ref[...] = jnp.zeros_like(out_ref)

    out_ref[...] += jnp.sum(x_ref[...].astype(jnp.float32), axis=-1)

    @pl.when(hi == pl.num_programs(1) - 1)
    def _():
        out_ref[...] = out_ref[...] * inv_hw


def _broadcast_kernel(y_ref, out_ref):
    """Pass B. grid over HW tiles ("parallel").

    y_ref:   (N, Cout, 1)         post-ReLU pooled value (constant block)
    out_ref: (N, Cout, tile_hw)   lane-dense NCHW output slab
    Bilinear upsample from a 1x1 source (align_corners=False) == broadcast.
    """
    out_ref[...] = jnp.broadcast_to(y_ref[...], out_ref.shape)


def splitted_ppm_forward(conv5_nchw, conv_w, bn_gamma, bn_beta, bn_mean, bn_var,
                         eps=1e-5, *, tile_c=None, tile_hw=None, tile_hw_out=None):
    """Equivalent of SplittedPPM(start=True, n_layers=1, final_conv=False).forward.

    conv5_nchw: (N, C, H, W)         NCHW feature map (f32 or bf16)
    conv_w:     (Cout, C, 1, 1)      1x1 conv weight, no bias
    bn_*:       (Cout,)              BatchNorm2d params / running stats (eval mode)
    Returns [conv5, upsampled_branch], both NCHW.
    """
    N, C, H, W = conv5_nchw.shape
    Cout = conv_w.shape[0]
    HW = H * W
    in_dtype = conv5_nchw.dtype
    in_bytes = jnp.dtype(in_dtype).itemsize
    out_dtype = in_dtype
    out_bytes = jnp.dtype(out_dtype).itemsize

    block_target, vmem_limit = _chip_budgets()

    # Free reshape: NCHW -> (N, C, HW), HW on lanes. No transpose of the big tensor.
    x = conv5_nchw.reshape(N, C, HW)

    # ---- Pass A tile selection (lane axis first, then C fills the byte budget) ----
    hw_a = HW
    if tile_hw is None:
        tile_hw = _largest_aligned_divisor(HW, 128, _LANE_TILE_CAP)
        if tile_hw is None:
            # Ragged H*W: zero-pad the spatial axis (sum-safe; mean uses true HW).
            hw_a = _round_up(HW, 128)
            x = jnp.pad(x, ((0, 0), (0, 0), (0, hw_a - HW)))
            tile_hw = _largest_aligned_divisor(hw_a, 128, _LANE_TILE_CAP)
    assert tile_hw is not None and hw_a % tile_hw == 0

    c_a = C
    if tile_c is None:
        cap_c = max(128, block_target // (N * tile_hw * in_bytes))
        tile_c = _largest_aligned_divisor(C, 128, cap_c)
        if tile_c is None:
            if N * C * tile_hw * in_bytes <= block_target:
                tile_c = C          # full-dim block is always layout-legal
            else:
                # Ragged C too large for one block: zero-pad the channel axis.
                c_a = _round_up(C, 128)
                x = jnp.pad(x, ((0, 0), (0, c_a - C), (0, 0)))
                tile_c = _largest_aligned_divisor(c_a, 128, cap_c)
    assert tile_c is not None and c_a % tile_c == 0

    blk_a = N * tile_c * tile_hw * in_bytes
    assert 2 * blk_a + 2 * N * c_a * 4 <= vmem_limit, (
        f"Pass A block ({blk_a} B, double-buffered) exceeds vmem limit {vmem_limit} B")

    grid_a = (c_a // tile_c, hw_a // tile_hw)

    pooled = pl.pallas_call(
        functools.partial(_pool_mean_kernel, inv_hw=float(1.0 / HW)),
        out_shape=jax.ShapeDtypeStruct((N, c_a), jnp.float32),
        grid_spec=pltpu.PrefetchScalarGridSpec(
            num_scalar_prefetch=0,
            grid=grid_a,
            in_specs=[pl.BlockSpec((N, tile_c, tile_hw), lambda ci, hi: (0, ci, hi))],
            out_specs=pl.BlockSpec((N, tile_c), lambda ci, hi: (0, ci)),
        ),
        compiler_params=pltpu.CompilerParams(
            # C axis "parallel": shards the HBM-bound reduction across both
            # TensorCores on v7x; harmless on single-TC v5e/v6e.
            dimension_semantics=("parallel", "arbitrary"),
            vmem_limit_bytes=vmem_limit,
        ),
        cost_estimate=pl.CostEstimate(
            flops=int(N * c_a * hw_a + N * c_a),
            transcendentals=0,
            bytes_accessed=int(N * c_a * hw_a * in_bytes + N * c_a * 4),
        ),
    )(x)

    # ---- 1x1 conv + folded BatchNorm (eval) + ReLU: tiny (N,C)x(C,Cout) XLA ops ----
    # Hoisted out of the kernel (review): the matmul is ~1 MFLOP, completely hidden,
    # and removing it frees the double-buffered weight VMEM in the streaming pass.
    w = jnp.transpose(conv_w.reshape(Cout, C), (1, 0)).astype(jnp.float32)
    inv_std = 1.0 / jnp.sqrt(bn_var.astype(jnp.float32) + eps)
    scale = bn_gamma.astype(jnp.float32) * inv_std
    bias = bn_beta.astype(jnp.float32) - bn_mean.astype(jnp.float32) * scale
    y = jnp.dot(pooled[:, :C], w, preferred_element_type=jnp.float32)   # (N, Cout)
    y = jnp.maximum(y * scale[None, :] + bias[None, :], 0.0)

    # ---- Pass B: broadcast the (N, Cout) value over HxW, lane-dense NCHW stores ----
    hw_b = HW
    if tile_hw_out is None:
        cap_b = max(128, block_target // (N * Cout * out_bytes))
        tile_hw_out = _largest_aligned_divisor(HW, 128, cap_b)
        if tile_hw_out is None:
            if N * Cout * HW * out_bytes <= block_target:
                tile_hw_out = HW    # single full-dim block
            else:
                # Ragged H*W: emit a padded slab and slice (one extra copy).
                hw_b = _round_up(HW, 128)
                tile_hw_out = _largest_aligned_divisor(hw_b, 128, cap_b)
    assert tile_hw_out is not None and hw_b % tile_hw_out == 0

    blk_b = N * Cout * tile_hw_out * out_bytes
    assert 2 * blk_b + 2 * N * Cout * out_bytes <= vmem_limit, (
        f"Pass B block ({blk_b} B, double-buffered) exceeds vmem limit {vmem_limit} B")

    grid_b = (hw_b // tile_hw_out,)
    y3 = y.astype(out_dtype).reshape(N, Cout, 1)

    out = pl.pallas_call(
        _broadcast_kernel,
        out_shape=jax.ShapeDtypeStruct((N, Cout, hw_b), out_dtype),
        grid_spec=pltpu.PrefetchScalarGridSpec(
            num_scalar_prefetch=0,
            grid=grid_b,
            in_specs=[pl.BlockSpec((N, Cout, 1), lambda t: (0, 0, 0))],
            out_specs=pl.BlockSpec((N, Cout, tile_hw_out), lambda t: (0, 0, t)),
        ),
        compiler_params=pltpu.CompilerParams(
            dimension_semantics=("parallel",),
            vmem_limit_bytes=vmem_limit,
        ),
        cost_estimate=pl.CostEstimate(
            flops=0,
            transcendentals=0,
            bytes_accessed=int(N * Cout * out_bytes + N * Cout * hw_b * out_bytes),
        ),
    )(y3)

    if hw_b != HW:
        out = out[:, :, :HW]
    branch = out.reshape(N, Cout, H, W)     # free reshape, already NCHW
    return [conv5_nchw, branch]


def _reference(conv5_nchw, conv_w, bn_gamma, bn_beta, bn_mean, bn_var, eps=1e-5):
    """Plain-JAX reference for the same forward pass (correctness check)."""
    N, C, H, W = conv5_nchw.shape
    Cout = conv_w.shape[0]
    pooled = jnp.mean(conv5_nchw.astype(jnp.float32), axis=(2, 3))    # (N, C)
    y = pooled @ conv_w.reshape(Cout, C).astype(jnp.float32).T        # (N, Cout)
    y = (y - bn_mean) / jnp.sqrt(bn_var + eps) * bn_gamma + bn_beta
    y = jnp.maximum(y, 0.0).astype(conv5_nchw.dtype)
    branch = jnp.broadcast_to(y[:, :, None, None], (N, Cout, H, W))
    return [conv5_nchw, branch]


if __name__ == "__main__":
    # Small shapes consistent with the module: fc_dim shrunk to 256 (module default
    # 4096), PPM bottleneck width kept at 512 as in the module definition.
    N, FC_DIM, H, W = 2, 256, 16, 16
    COUT = 512
    seg_size = (64, 64)   # forward asserts segSize is not None (unused in this config)

    key = jax.random.PRNGKey(0)
    k_x, k_w, k_g, k_b, k_m, k_v = jax.random.split(key, 6)

    conv5 = jax.random.normal(k_x, (N, FC_DIM, H, W), dtype=jnp.float32)
    conv_w = jax.random.normal(k_w, (COUT, FC_DIM, 1, 1), dtype=jnp.float32) * 0.02
    bn_gamma = 1.0 + 0.1 * jax.random.normal(k_g, (COUT,), dtype=jnp.float32)
    bn_beta = 0.1 * jax.random.normal(k_b, (COUT,), dtype=jnp.float32)
    bn_mean = 0.1 * jax.random.normal(k_m, (COUT,), dtype=jnp.float32)
    bn_var = 1.0 + 0.1 * jnp.abs(jax.random.normal(k_v, (COUT,), dtype=jnp.float32))

    # Module receives a list of feature maps; start=True uses x[-1].
    features = [conv5]
    assert seg_size is not None

    ref_list = _reference(features[-1], conv_w, bn_gamma, bn_beta, bn_mean, bn_var)

    # 1) Auto-selected per-chip tiles (single-step grid at these toy shapes).
    out_list = splitted_ppm_forward(features[-1], conv_w, bn_gamma, bn_beta,
                                    bn_mean, bn_var)
    out_list = [jax.block_until_ready(o) for o in out_list]
    for got, ref in zip(out_list, ref_list):
        assert got.shape == ref.shape and got.dtype == ref.dtype
        assert jnp.allclose(got, ref, atol=2e-4, rtol=2e-4)

    # 2) Forced small tiles: multi-step (2x2) reduction grid (init/accumulate/
    #    finalize path + "parallel" C axis with several blocks) and a 2-step
    #    parallel broadcast grid.
    out_list = splitted_ppm_forward(features[-1], conv_w, bn_gamma, bn_beta,
                                    bn_mean, bn_var,
                                    tile_c=128, tile_hw=128, tile_hw_out=128)
    out_list = [jax.block_until_ready(o) for o in out_list]
    for got, ref in zip(out_list, ref_list):
        assert got.shape == ref.shape and got.dtype == ref.dtype
        assert jnp.allclose(got, ref, atol=2e-4, rtol=2e-4)

    print("KERNEL_OK")
</pallas_src>

<mosaic_0001>
module attributes {stable_mosaic.version = 11 : i64} {
  func.func @_pool_mean_kernel(%arg0: i32, %arg1: i32, %arg2: memref<2x256x256xf32, #tpu.memory_space<vmem>>, %arg3: memref<2x256xf32, #tpu.memory_space<vmem>>) attributes {dimension_semantics = [#tpu.dimension_semantics<parallel>, #tpu.dimension_semantics<arbitrary>], iteration_bounds = array<i64: 1, 1>, scalar_prefetch = 0 : i64, scratch_operands = 0 : i64, tpu.core_type = #tpu.core_type<tc>, window_params = [{transform_indices = @transform_0, window_bounds = array<i64: 2, 256, 256>}, {transform_indices = @transform_1, window_bounds = array<i64: 2, 256>}]} {
    %c0_i32 = arith.constant 0 : i32
    %0 = arith.cmpi eq, %arg1, %c0_i32 : i32
    %1 = arith.extui %0 : i1 to i32
    %c0_i32_0 = arith.constant 0 : i32
    %2 = arith.cmpi ne, %1, %c0_i32_0 : i32
    scf.if %2 {
      %cst_9 = arith.constant 0.000000e+00 : f32
      %11 = vector.broadcast %cst_9 : f32 to vector<2x256xf32>
      %c0_10 = arith.constant 0 : index
      %c0_11 = arith.constant 0 : index
      %12 = vector.load %arg3[%c0_10, %c0_11] : memref<2x256xf32, #tpu.memory_space<vmem>>, vector<2x256xf32>
      tpu.vector_store %arg3[%c0_10, %c0_11], %11 {strides = array<i32>} : memref<2x256xf32, #tpu.memory_space<vmem>>, vector<2x256xf32>,
    } else {
    }
    %c0 = arith.constant 0 : index
    %c0_1 = arith.constant 0 : index
    %3 = vector.load %arg3[%c0, %c0_1] : memref<2x256xf32, #tpu.memory_space<vmem>>, vector<2x256xf32>
    %c0_2 = arith.constant 0 : index
    %c0_3 = arith.constant 0 : index
    %c0_4 = arith.constant 0 : index
    %4 = vector.load %arg2[%c0_2, %c0_3, %c0_4] : memref<2x256x256xf32, #tpu.memory_space<vmem>>, vector<2x256x256xf32>
    %cst = arith.constant dense<0.000000e+00> : vector<2x256xf32>
    %5 = vector.multi_reduction <add>, %4, %cst [2] : vector<2x256x256xf32> to vector<2x256xf32>
    %6 = arith.addf %3, %5 : vector<2x256xf32>
    %c0_5 = arith.constant 0 : index
    %c0_6 = arith.constant 0 : index
    %7 = vector.load %arg3[%c0_5, %c0_6] : memref<2x256xf32, #tpu.memory_space<vmem>>, vector<2x256xf32>
    tpu.vector_store %arg3[%c0_5, %c0_6], %6 {strides = array<i32>} : memref<2x256xf32, #tpu.memory_space<vmem>>, vector<2x256xf32>,
    %c0_i32_7 = arith.constant 0 : i32
    %8 = arith.cmpi eq, %arg1, %c0_i32_7 : i32
    %9 = arith.extui %8 : i1 to i32
    %c0_i32_8 = arith.constant 0 : i32
    %10 = arith.cmpi ne, %9, %c0_i32_8 : i32
    scf.if %10 {
      %c0_9 = arith.constant 0 : index
      %c0_10 = arith.constant 0 : index
      %11 = vector.load %arg3[%c0_9, %c0_10] : memref<2x256xf32, #tpu.memory_space<vmem>>, vector<2x256xf32>
      %cst_11 = arith.constant 3.906250e-03 : f32
      %12 = vector.broadcast %cst_11 : f32 to vector<2x256xf32>
      %13 = arith.mulf %11, %12 : vector<2x256xf32>
      %c0_12 = arith.constant 0 : index
      %c0_13 = arith.constant 0 : index
      %14 = vector.load %arg3[%c0_12, %c0_13] : memref<2x256xf32, #tpu.memory_space<vmem>>, vector<2x256xf32>
      tpu.vector_store %arg3[%c0_12, %c0_13], %13 {strides = array<i32>} : memref<2x256xf32, #tpu.memory_space<vmem>>, vector<2x256xf32>,
    } else {
    }
    return
  }
  func.func @transform_0(%arg0: i32, %arg1: i32) -> (i32, i32, i32) {
    %c0_i32 = arith.constant 0 : i32
    %c0_i32_0 = arith.constant 0 : i32
    return %c0_i32, %arg0, %arg1 : i32, i32, i32
  }
  func.func @transform_1(%arg0: i32, %arg1: i32) -> (i32, i32) {
    %c0_i32 = arith.constant 0 : i32
    %c0_i32_0 = arith.constant 0 : i32
    return %c0_i32, %arg0 : i32, i32
  }
}

</mosaic_0001>

<llo_original>
// kernel: tpu_custom_call.1
$region0: #{tpu_custom_call.1}
  #allocation0 [shape = 'u32[]', space=smem, size = 0x4, offset = 0x4, fixed_abs, tag = 'smem constant byte address 0x4 - core index']
  #allocation1 [shape = 'u32[144,128]{1,0:T(1,128)}', space=vmem, size = 0x12000, scoped, tag = 'internal scratch']
  %s0 = inlined_call_operand.hbm [shape: f32[2,256,256], index: 0, kind: input, shape index: {}]
  %s1 = inlined_call_operand.hbm [shape: f32[2,256], index: 1, kind: output, shape index: {}]
  %s2 = sld [smem:[#allocation0]]
  $region26: #{tpu_custom_call.1} parent=0
    _
  %s4 = ssub.s32 1, %s2
  %s5 = scalar_select 0, %s4, %s2
  $region1: #{tpu_custom_call.1} parent=0
    #allocation2 [shape = 'u8[524288]{0}', space=vmem, size = 0x80000, scoped, tag = 'input window, operand 0, single buffered']
    #allocation3 [shape = 's32[1]{0}', space=sflag, size = 0x4, scoped, tag = 'scoped memory for tpu_custom_call.1']
    #allocation4 [shape = 's32[1]{0}', space=sflag, size = 0x4, scoped, tag = 'scoped memory for tpu_custom_call.1']
    #allocation5 [shape = 'u8[2048]{0}', space=vmem, size = 0x800, scoped, tag = 'output window, operand 0, single buffered']
    %6 = vsyncpa [#allocation3], 0
    %7 = vsyncpa [#allocation4], 0
    // Predicated region
    $region2: #{tpu_custom_call.1} parent=1 // pred_check
      _
    $region3: #{tpu_custom_call.1} parent=1 // pred_check_branch
      %9 = sbr.rel (0) target = $region5
    $region4: #{tpu_custom_call.1} parent=1 // pred_region
      %s11 = ssub.s32 16384, 16384
      %12 = vsyncadd [#allocation3], %s11
      %s13 = sshll.u32 [#allocation2], 4
      %s14 = int_to_ptr.vmem [resolvable:$true] %s13
      %19 = dma.hbm_to_vmem [thread:$0]  %s0, 16384, %s14, [#allocation3], 256, 256, 16
    $region5: #{tpu_custom_call.1} parent=1 // pred_fallthru
      _
    // Predicated region
    $region6: #{tpu_custom_call.1} parent=1 // pred_check
      _
    $region7: #{tpu_custom_call.1} parent=1 // pred_check_branch
      %21 = sbr.rel (0) target = $region9
    $region8: #{tpu_custom_call.1} parent=1 // pred_region
      %22 = dma.done [#allocation3], 16384
    $region9: #{tpu_custom_call.1} parent=1 // pred_fallthru
      _
    %p23 = scmp.eq.s32.totalorder 0, 0
    // Predicated region
    $region10: #{tpu_custom_call.1} parent=1 // pred_check
      %p24 = pneg %p23
    $region11: #{tpu_custom_call.1} parent=1 // pred_check_branch
      %26 = sbr.rel (%p24) target = $region13
    $region12: #{tpu_custom_call.1} parent=1 // pred_region
      %27 = vst [vmem:[#allocation5] sm:$0xf] 0.0
    $region13: #{tpu_custom_call.1} parent=1 // pred_fallthru
      _
    %v28 = vld [vmem:[#allocation5] sm:$0xf]
    %v29 = vld [vmem:[#allocation2] sm:$0xff]
    %v30 = vld [vmem:[#allocation2 + $0x8] sm:$0xff]
    %v31 = vld [vmem:[#allocation2 + $0x10] sm:$0xff]
    %v32 = vld [vmem:[#allocation2 + $0x18] sm:$0xff]
    %v33 = vld [vmem:[#allocation2 + $0x20] sm:$0xff]
    %v34 = vld [vmem:[#allocation2 + $0x28] sm:$0xff]
    %v35 = vld [vmem:[#allocation2 + $0x30] sm:$0xff]
    %v36 = vld [vmem:[#allocation2 + $0x38] sm:$0xff]
    %v37 = vld [vmem:[#allocation2 + $0x40] sm:$0xff]
    %v38 = vld [vmem:[#allocation2 + $0x48] sm:$0xff]
    %v39 = vld [vmem:[#allocation2 + $0x50] sm:$0xff]
    %v40 = vld [vmem:[#allocation2 + $0x58] sm:$0xff]
    %v41 = vld [vmem:[#allocation2 + $0x60] sm:$0xff]
    %v42 = vld [vmem:[#allocation2 + $0x68] sm:$0xff]
    %v43 = vld [vmem:[#allocation2 + $0x70] sm:$0xff]
    %v44 = vld [vmem:[#allocation2 + $0x78] sm:$0xff]
    %v45 = vld [vmem:[#allocation2 + $0x80] sm:$0xff]
    %v46 = vld [vmem:[#allocation2 + $0x88] sm:$0xff]
    %v47 = vld [vmem:[#allocation2 + $0x90] sm:$0xff]
    %v48 = vld [vmem:[#allocation2 + $0x98] sm:$0xff]
    %v49 = vld [vmem:[#allocation2 + $0xa0] sm:$0xff]
    %v50 = vld [vmem:[#allocation2 + $0xa8] sm:$0xff]
    %v51 = vld [vmem:[#allocation2 + $0xb0] sm:$0xff]
    %v52 = vld [vmem:[#allocation2 + $0xb8] sm:$0xff]
    %v53 = vld [vmem:[#allocation2 + $0xc0] sm:$0xff]
    %v54 = vld [vmem:[#allocation2 + $0xc8] sm:$0xff]
    %v55 = vld [vmem:[#allocation2 + $0xd0] sm:$0xff]
    %v56 = vld [vmem:[#allocation2 + $0xd8] sm:$0xff]
    %v57 = vld [vmem:[#allocation2 + $0xe0] sm:$0xff]
    %v58 = vld [vmem:[#allocation2 + $0xe8] sm:$0xff]
    %v59 = vld [vmem:[#allocation2 + $0xf0] sm:$0xff]
    %v60 = vld [vmem:[#allocation2 + $0xf8] sm:$0xff]
    %v61 = vld [vmem:[#allocation2 + $0x100] sm:$0xff]
    %v62 = vld [vmem:[#allocation2 + $0x108] sm:$0xff]
    %v63 = vld [vmem:[#allocation2 + $0x110] sm:$0xff]
    %v64 = vld [vmem:[#allocation2 + $0x118] sm:$0xff]
    %v65 = vld [vmem:[#allocation2 + $0x120] sm:$0xff]
    %v66 = vld [vmem:[#allocation2 + $0x128] sm:$0xff]
    %v67 = vld [vmem:[#allocation2 + $0x130] sm:$0xff]
    %v68 = vld [vmem:[#allocation2 + $0x138] sm:$0xff]
    %v69 = vld [vmem:[#allocation2 + $0x140] sm:$0xff]
    %v70 = vld [vmem:[#allocation2 + $0x148] sm:$0xff]
    %v71 = vld [vmem:[#allocation2 + $0x150] sm:$0xff]
    %v72 = vld [vmem:[#allocation2 + $0x158] sm:$0xff]
    %v73 = vld [vmem:[#allocation2 + $0x160] sm:$0xff]
    %v74 = vld [vmem:[#allocation2 + $0x168] sm:$0xff]
    %v75 = vld [vmem:[#allocation2 + $0x170] sm:$0xff]
    %v76 = vld [vmem:[#allocation2 + $0x178] sm:$0xff]
    %v77 = vld [vmem:[#allocation2 + $0x180] sm:$0xff]
    %v78 = vld [vmem:[#allocation2 + $0x188] sm:$0xff]
    %v79 = vld [vmem:[#allocation2 + $0x190] sm:$0xff]
    %v80 = vld [vmem:[#allocation2 + $0x198] sm:$0xff]
    %v81 = vld [vmem:[#allocation2 + $0x1a0] sm:$0xff]
    %v82 = vld [vmem:[#allocation2 + $0x1a8] sm:$0xff]
    %v83 = vld [vmem:[#allocation2 + $0x1b0] sm:$0xff]
    %v84 = vld [vmem:[#allocation2 + $0x1b8] sm:$0xff]
    %v85 = vld [vmem:[#allocation2 + $0x1c0] sm:$0xff]
    %v86 = vld [vmem:[#allocation2 + $0x1c8] sm:$0xff]
    %v87 = vld [vmem:[#allocation2 + $0x1d0] sm:$0xff]
    %v88 = vld [vmem:[#allocation2 + $0x1d8] sm:$0xff]
    %v89 = vld [vmem:[#allocation2 + $0x1e0] sm:$0xff]
    %v90 = vld [vmem:[#allocation2 + $0x1e8] sm:$0xff]
    %v91 = vld [vmem:[#allocation2 + $0x1f0] sm:$0xff]
    %v92 = vld [vmem:[#allocation2 + $0x1f8] sm:$0xff]
    %v93 = vld [vmem:[#allocation2 + $0x200] sm:$0xff]
    %v94 = vld [vmem:[#allocation2 + $0x208] sm:$0xff]
    %v95 = vld [vmem:[#allocation2 + $0x210] sm:$0xff]
    %v96 = vld [vmem:[#allocation2 + $0x218] sm:$0xff]
    %v97 = vld [vmem:[#allocation2 + $0x220] sm:$0xff]
    %v98 = vld [vmem:[#allocation2 + $0x228] sm:$0xff]
    %v99 = vld [vmem:[#allocation2 + $0x230] sm:$0xff]
    %v100 = vld [vmem:[#allocation2 + $0x238] sm:$0xff]
    %v101 = vld [vmem:[#allocation2 + $0x240] sm:$0xff]
    %v102 = vld [vmem:[#allocation2 + $0x248] sm:$0xff]
    %v103 = vld [vmem:[#allocation2 + $0x250] sm:$0xff]
    %v104 = vld [vmem:[#allocation2 + $0x258] sm:$0xff]
    %v105 = vld [vmem:[#allocation2 + $0x260] sm:$0xff]
    %v106 = vld [vmem:[#allocation2 + $0x268] sm:$0xff]
    %v107 = vld [vmem:[#allocation2 + $0x270] sm:$0xff]
    %v108 = vld [vmem:[#allocation2 + $0x278] sm:$0xff]
    %v109 = vld [vmem:[#allocation2 + $0x280] sm:$0xff]
    %v110 = vld [vmem:[#allocation2 + $0x288] sm:$0xff]
    %v111 = vld [vmem:[#allocation2 + $0x290] sm:$0xff]
    %v112 = vld [vmem:[#allocation2 + $0x298] sm:$0xff]
    %v113 = vld [vmem:[#allocation2 + $0x2a0] sm:$0xff]
    %v114 = vld [vmem:[#allocation2 + $0x2a8] sm:$0xff]
    %v115 = vld [vmem:[#allocation2 + $0x2b0] sm:$0xff]
    %v116 = vld [vmem:[#allocation2 + $0x2b8] sm:$0xff]
    %v117 = vld [vmem:[#allocation2 + $0x2c0] sm:$0xff]
    %v118 = vld [vmem:[#allocation2 + $0x2c8] sm:$0xff]
    %v119 = vld [vmem:[#allocation2 + $0x2d0] sm:$0xff]
    %v120 = vld [vmem:[#allocation2 + $0x2d8] sm:$0xff]
    %v121 = vld [vmem:[#allocation2 + $0x2e0] sm:$0xff]
    %v122 = vld [vmem:[#allocation2 + $0x2e8] sm:$0xff]
    %v123 = vld [vmem:[#allocation2 + $0x2f0] sm:$0xff]
    %v124 = vld [vmem:[#allocation2 + $0x2f8] sm:$0xff]
    %v125 = vld [vmem:[#allocation2 + $0x300] sm:$0xff]
    %v126 = vld [vmem:[#allocation2 + $0x308] sm:$0xff]
    %v127 = vld [vmem:[#allocation2 + $0x310] sm:$0xff]
    %v128 = vld [vmem:[#allocation2 + $0x318] sm:$0xff]
    %v129 = vld [vmem:[#allocation2 + $0x320] sm:$0xff]
    %v130 = vld [vmem:[#allocation2 + $0x328] sm:$0xff]
    %v131 = vld [vmem:[#allocation2 + $0x330] sm:$0xff]
    %v132 = vld [vmem:[#allocation2 + $0x338] sm:$0xff]
    %v133 = vld [vmem:[#allocation2 + $0x340] sm:$0xff]
    %v134 = vld [vmem:[#allocation2 + $0x348] sm:$0xff]
    %v135 = vld [vmem:[#allocation2 + $0x350] sm:$0xff]
    %v136 = vld [vmem:[#allocation2 + $0x358] sm:$0xff]
    %v137 = vld [vmem:[#allocation2 + $0x360] sm:$0xff]
    %v138 = vld [vmem:[#allocation2 + $0x368] sm:$0xff]
    %v139 = vld [vmem:[#allocation2 + $0x370] sm:$0xff]
    %v140 = vld [vmem:[#allocation2 + $0x378] sm:$0xff]
    %v141 = vld [vmem:[#allocation2 + $0x380] sm:$0xff]
    %v142 = vld [vmem:[#allocation2 + $0x388] sm:$0xff]
    %v143 = vld [vmem:[#allocation2 + $0x390] sm:$0xff]
    %v144 = vld [vmem:[#allocation2 + $0x398] sm:$0xff]
    %v145 = vld [vmem:[#allocation2 + $0x3a0] sm:$0xff]
    %v146 = vld [vmem:[#allocation2 + $0x3a8] sm:$0xff]
    %v147 = vld [vmem:[#allocation2 + $0x3b0] sm:$0xff]
    %v148 = vld [vmem:[#allocation2 + $0x3b8] sm:$0xff]
    %v149 = vld [vmem:[#allocation2 + $0x3c0] sm:$0xff]
    %v150 = vld [vmem:[#allocation2 + $0x3c8] sm:$0xff]
    %v151 = vld [vmem:[#allocation2 + $0x3d0] sm:$0xff]
    %v152 = vld [vmem:[#allocation2 + $0x3d8] sm:$0xff]
    %v153 = vld [vmem:[#allocation2 + $0x3e0] sm:$0xff]
    %v154 = vld [vmem:[#allocation2 + $0x3e8] sm:$0xff]
    %v155 = vld [vmem:[#allocation2 + $0x3f0] sm:$0xff]
    %v156 = vld [vmem:[#allocation2 + $0x3f8] sm:$0xff]
    %v157 = vadd.f32 %v29, %v30
    %158 = vadd.xlane.f32.xlu0 %v157
    %v159 = vpop.xlane.xlu0 %158
    %v160 = vadd.f32 %v31, %v32
    %161 = vadd.xlane.f32.xlu0 %v160
    %v162 = vpop.xlane.xlu0 %161
    %v163 = vadd.f32 %v33, %v34
    %164 = vadd.xlane.f32.xlu0 %v163
    %v165 = vpop.xlane.xlu0 %164
    %v166 = vadd.f32 %v35, %v36
    %167 = vadd.xlane.f32.xlu0 %v166
    %v168 = vpop.xlane.xlu0 %167
    %v169 = vadd.f32 %v37, %v38
    %170 = vadd.xlane.f32.xlu0 %v169
    %v171 = vpop.xlane.xlu0 %170
    %v172 = vadd.f32 %v39, %v40
    %173 = vadd.xlane.f32.xlu0 %v172
    %v174 = vpop.xlane.xlu0 %173
    %v175 = vadd.f32 %v41, %v42
    %176 = vadd.xlane.f32.xlu0 %v175
    %v177 = vpop.xlane.xlu0 %176
    %v178 = vadd.f32 %v43, %v44
    %179 = vadd.xlane.f32.xlu0 %v178
    %v180 = vpop.xlane.xlu0 %179
    %v181 = vadd.f32 %v45, %v46
    %182 = vadd.xlane.f32.xlu0 %v181
    %v183 = vpop.xlane.xlu0 %182
    %v184 = vadd.f32 %v47, %v48
    %185 = vadd.xlane.f32.xlu0 %v184
    %v186 = vpop.xlane.xlu0 %185
    %v187 = vadd.f32 %v49, %v50
    %188 = vadd.xlane.f32.xlu0 %v187
    %v189 = vpop.xlane.xlu0 %188
    %v190 = vadd.f32 %v51, %v52
    %191 = vadd.xlane.f32.xlu0 %v190
    %v192 = vpop.xlane.xlu0 %191
    %v193 = vadd.f32 %v53, %v54
    %194 = vadd.xlane.f32.xlu0 %v193
    %v195 = vpop.xlane.xlu0 %194
    %v196 = vadd.f32 %v55, %v56
    %197 = vadd.xlane.f32.xlu0 %v196
    %v198 = vpop.xlane.xlu0 %197
    %v199 = vadd.f32 %v57, %v58
    %200 = vadd.xlane.f32.xlu0 %v199
    %v201 = vpop.xlane.xlu0 %200
    %v202 = vadd.f32 %v59, %v60
    %203 = vadd.xlane.f32.xlu0 %v202
    %v204 = vpop.xlane.xlu0 %203
    %v205 = vadd.f32 %v61, %v62
    %206 = vadd.xlane.f32.xlu0 %v205
    %v207 = vpop.xlane.xlu0 %206
    %v208 = vadd.f32 %v63, %v64
    %209 = vadd.xlane.f32.xlu0 %v208
    %v210 = vpop.xlane.xlu0 %209
    %v211 = vadd.f32 %v65, %v66
    %212 = vadd.xlane.f32.xlu0 %v211
    %v213 = vpop.xlane.xlu0 %212
    %v214 = vadd.f32 %v67, %v68
    %215 = vadd.xlane.f32.xlu0 %v214
    %v216 = vpop.xlane.xlu0 %215
    %v217 = vadd.f32 %v69, %v70
    %218 = vadd.xlane.f32.xlu0 %v217
    %v219 = vpop.xlane.xlu0 %218
    %v220 = vadd.f32 %v71, %v72
    %221 = vadd.xlane.f32.xlu0 %v220
    %v222 = vpop.xlane.xlu0 %221
    %v223 = vadd.f32 %v73, %v74
    %224 = vadd.xlane.f32.xlu0 %v223
    %v225 = vpop.xlane.xlu0 %224
    %v226 = vadd.f32 %v75, %v76
    %227 = vadd.xlane.f32.xlu0 %v226
    %v228 = vpop.xlane.xlu0 %227
    %v229 = vadd.f32 %v77, %v78
    %230 = vadd.xlane.f32.xlu0 %v229
    %v231 = vpop.xlane.xlu0 %230
    %v232 = vadd.f32 %v79, %v80
    %233 = vadd.xlane.f32.xlu0 %v232
    %v234 = vpop.xlane.xlu0 %233
    %v235 = vadd.f32 %v81, %v82
    %236 = vadd.xlane.f32.xlu0 %v235
    %v237 = vpop.xlane.xlu0 %236
    %v238 = vadd.f32 %v83, %v84
    %239 = vadd.xlane.f32.xlu0 %v238
    %v240 = vpop.xlane.xlu0 %239
    %v241 = vadd.f32 %v85, %v86
    %242 = vadd.xlane.f32.xlu0 %v241
    %v243 = vpop.xlane.xlu0 %242
    %v244 = vadd.f32 %v87, %v88
    %245 = vadd.xlane.f32.xlu0 %v244
    %v246 = vpop.xlane.xlu0 %245
    %v247 = vadd.f32 %v89, %v90
    %248 = vadd.xlane.f32.xlu0 %v247
    %v249 = vpop.xlane.xlu0 %248
    %v250 = vadd.f32 %v91, %v92
    %251 = vadd.xlane.f32.xlu0 %v250
    %v252 = vpop.xlane.xlu0 %251
    %v253 = vadd.f32 %v93, %v94
    %254 = vadd.xlane.f32.xlu0 %v253
    %v255 = vpop.xlane.xlu0 %254
    %v256 = vadd.f32 %v95, %v96
    %257 = vadd.xlane.f32.xlu0 %v256
    %v258 = vpop.xlane.xlu0 %257
    %v259 = vadd.f32 %v97, %v98
    %260 = vadd.xlane.f32.xlu0 %v259
    %v261 = vpop.xlane.xlu0 %260
    %v262 = vadd.f32 %v99, %v100
    %263 = vadd.xlane.f32.xlu0 %v262
    %v264 = vpop.xlane.xlu0 %263
    %v265 = vadd.f32 %v101, %v102
    %266 = vadd.xlane.f32.xlu0 %v265
    %v267 = vpop.xlane.xlu0 %266
    %v268 = vadd.f32 %v103, %v104
    %269 = vadd.xlane.f32.xlu0 %v268
    %v270 = vpop.xlane.xlu0 %269
    %v271 = vadd.f32 %v105, %v106
    %272 = vadd.xlane.f32.xlu0 %v271
    %v273 = vpop.xlane.xlu0 %272
    %v274 = vadd.f32 %v107, %v108
    %275 = vadd.xlane.f32.xlu0 %v274
    %v276 = vpop.xlane.xlu0 %275
    %v277 = vadd.f32 %v109, %v110
    %278 = vadd.xlane.f32.xlu0 %v277
    %v279 = vpop.xlane.xlu0 %278
    %v280 = vadd.f32 %v111, %v112
    %281 = vadd.xlane.f32.xlu0 %v280
    %v282 = vpop.xlane.xlu0 %281
    %v283 = vadd.f32 %v113, %v114
    %284 = vadd.xlane.f32.xlu0 %v283
    %v285 = vpop.xlane.xlu0 %284
    %v286 = vadd.f32 %v115, %v116
    %287 = vadd.xlane.f32.xlu0 %v286
    %v288 = vpop.xlane.xlu0 %287
    %v289 = vadd.f32 %v117, %v118
    %290 = vadd.xlane.f32.xlu0 %v289
    %v291 = vpop.xlane.xlu0 %290
    %v292 = vadd.f32 %v119, %v120
    %293 = vadd.xlane.f32.xlu0 %v292
    %v294 = vpop.xlane.xlu0 %293
    %v295 = vadd.f32 %v121, %v122
    %296 = vadd.xlane.f32.xlu0 %v295
    %v297 = vpop.xlane.xlu0 %296
    %v298 = vadd.f32 %v123, %v124
    %299 = vadd.xlane.f32.xlu0 %v298
    %v300 = vpop.xlane.xlu0 %299
    %v301 = vadd.f32 %v125, %v126
    %302 = vadd.xlane.f32.xlu0 %v301
    %v303 = vpop.xlane.xlu0 %302
    %v304 = vadd.f32 %v127, %v128
    %305 = vadd.xlane.f32.xlu0 %v304
    %v306 = vpop.xlane.xlu0 %305
    %v307 = vadd.f32 %v129, %v130
    %308 = vadd.xlane.f32.xlu0 %v307
    %v309 = vpop.xlane.xlu0 %308
    %v310 = vadd.f32 %v131, %v132
    %311 = vadd.xlane.f32.xlu0 %v310
    %v312 = vpop.xlane.xlu0 %311
    %v313 = vadd.f32 %v133, %v134
    %314 = vadd.xlane.f32.xlu0 %v313
    %v315 = vpop.xlane.xlu0 %314
    %v316 = vadd.f32 %v135, %v136
    %317 = vadd.xlane.f32.xlu0 %v316
    %v318 = vpop.xlane.xlu0 %317
    %v319 = vadd.f32 %v137, %v138
    %320 = vadd.xlane.f32.xlu0 %v319
    %v321 = vpop.xlane.xlu0 %320
    %v322 = vadd.f32 %v139, %v140
    %323 = vadd.xlane.f32.xlu0 %v322
    %v324 = vpop.xlane.xlu0 %323
    %v325 = vadd.f32 %v141, %v142
    %326 = vadd.xlane.f32.xlu0 %v325
    %v327 = vpop.xlane.xlu0 %326
    %v328 = vadd.f32 %v143, %v144
    %329 = vadd.xlane.f32.xlu0 %v328
    %v330 = vpop.xlane.xlu0 %329
    %v331 = vadd.f32 %v145, %v146
    %332 = vadd.xlane.f32.xlu0 %v331
    %v333 = vpop.xlane.xlu0 %332
    %v334 = vadd.f32 %v147, %v148
    %335 = vadd.xlane.f32.xlu0 %v334
    %v336 = vpop.xlane.xlu0 %335
    %v337 = vadd.f32 %v149, %v150
    %338 = vadd.xlane.f32.xlu0 %v337
    %v339 = vpop.xlane.xlu0 %338
    %v340 = vadd.f32 %v151, %v152
    %341 = vadd.xlane.f32.xlu0 %v340
    %v342 = vpop.xlane.xlu0 %341
    %v343 = vadd.f32 %v153, %v154
    %344 = vadd.xlane.f32.xlu0 %v343
    %v345 = vpop.xlane.xlu0 %344
    %v346 = vadd.f32 %v155, %v156
    %347 = vadd.xlane.f32.xlu0 %v346
    %v348 = vpop.xlane.xlu0 %347
    %v414 = vunpack.c.l.s4 269488144
    %v415 = vunpack.c.0.s8 %v414
    %v416 = vlaneseq
    %v417 = vshrl.u32 %v416, 7
    %v418 = vsub.s32 %v415, %v417
    %v419 = vrot.slane %v159, %v418
    %v421 = vunpack.c.l.s4 842150450
    %v422 = vunpack.c.0.s8 %v421
    %v423 = vlaneseq
    %v424 = vshrl.u32 %v423, 7
    %v425 = vsub.s32 %v422, %v424
    %v426 = vrot.slane %v159, %v425
    %v428 = vunpack.c.l.s4 1414812756
    %v429 = vunpack.c.0.s8 %v428
    %v430 = vlaneseq
    %v431 = vshrl.u32 %v430, 7
    %v432 = vsub.s32 %v429, %v431
    %v433 = vrot.slane %v159, %v432
    %v435 = vunpack.c.l.s4 1987475062
    %v436 = vunpack.c.0.s8 %v435
    %v437 = vlaneseq
    %v438 = vshrl.u32 %v437, 7
    %v439 = vsub.s32 %v436, %v438
    %v440 = vrot.slane %v159, %v439
    %v442 = vunpack.c.l.s4 269488144
    %v443 = vunpack.c.0.s8 %v442
    %v444 = vlaneseq
    %v445 = vshrl.u32 %v444, 7
    %v446 = vsub.s32 %v443, %v445
    %v447 = vrot.slane %v162, %v446
    %v449 = vunpack.c.l.s4 842150450
    %v450 = vunpack.c.0.s8 %v449
    %v451 = vlaneseq
    %v452 = vshrl.u32 %v451, 7
    %v453 = vsub.s32 %v450, %v452
    %v454 = vrot.slane %v162, %v453
    %v456 = vunpack.c.l.s4 1414812756
    %v457 = vunpack.c.0.s8 %v456
    %v458 = vlaneseq
    %v459 = vshrl.u32 %v458, 7
    %v460 = vsub.s32 %v457, %v459
    %v461 = vrot.slane %v162, %v460
    %v463 = vunpack.c.l.s4 1987475062
    %v464 = vunpack.c.0.s8 %v463
    %v465 = vlaneseq
    %v466 = vshrl.u32 %v465, 7
    %v467 = vsub.s32 %v464, %v466
    %v468 = vrot.slane %v162, %v467
    %v470 = vunpack.c.l.s4 269488144
    %v471 = vunpack.c.0.s8 %v470
    %v472 = vlaneseq
    %v473 = vshrl.u32 %v472, 7
    %v474 = vsub.s32 %v471, %v473
    %v475 = vrot.slane %v165, %v474
    %v477 = vunpack.c.l.s4 842150450
    %v478 = vunpack.c.0.s8 %v477
    %v479 = vlaneseq
    %v480 = vshrl.u32 %v479, 7
    %v481 = vsub.s32 %v478, %v480
    %v482 = vrot.slane %v165, %v481
    %v484 = vunpack.c.l.s4 1414812756
    %v485 = vunpack.c.0.s8 %v484
    %v486 = vlaneseq
    %v487 = vshrl.u32 %v486, 7
    %v488 = vsub.s32 %v485, %v487
    %v489 = vrot.slane %v165, %v488
    %v491 = vunpack.c.l.s4 1987475062
    %v492 = vunpack.c.0.s8 %v491
    %v493 = vlaneseq
    %v494 = vshrl.u32 %v493, 7
    %v495 = vsub.s32 %v492, %v494
    %v496 = vrot.slane %v165, %v495
    %v498 = vunpack.c.l.s4 269488144
    %v499 = vunpack.c.0.s8 %v498
    %v500 = vlaneseq
    %v501 = vshrl.u32 %v500, 7
    %v502 = vsub.s32 %v499, %v501
    %v503 = vrot.slane %v168, %v502
    %v505 = vunpack.c.l.s4 842150450
    %v506 = vunpack.c.0.s8 %v505
    %v507 = vlaneseq
    %v508 = vshrl.u32 %v507, 7
    %v509 = vsub.s32 %v506, %v508
    %v510 = vrot.slane %v168, %v509
    %v512 = vunpack.c.l.s4 1414812756
    %v513 = vunpack.c.0.s8 %v512
    %v514 = vlaneseq
    %v515 = vshrl.u32 %v514, 7
    %v516 = vsub.s32 %v513, %v515
    %v517 = vrot.slane %v168, %v516
    %v519 = vunpack.c.l.s4 1987475062
    %v520 = vunpack.c.0.s8 %v519
    %v521 = vlaneseq
    %v522 = vshrl.u32 %v521, 7
    %v523 = vsub.s32 %v520, %v522
    %v524 = vrot.slane %v168, %v523
    %v526 = vunpack.c.l.s4 269488144
    %v527 = vunpack.c.0.s8 %v526
    %v528 = vlaneseq
    %v529 = vshrl.u32 %v528, 7
    %v530 = vsub.s32 %v527, %v529
    %v531 = vrot.slane %v171, %v530
    %v533 = vunpack.c.l.s4 842150450
    %v534 = vunpack.c.0.s8 %v533
    %v535 = vlaneseq
    %v536 = vshrl.u32 %v535, 7
    %v537 = vsub.s32 %v534, %v536
    %v538 = vrot.slane %v171, %v537
    %v540 = vunpack.c.l.s4 1414812756
    %v541 = vunpack.c.0.s8 %v540
    %v542 = vlaneseq
    %v543 = vshrl.u32 %v542, 7
    %v544 = vsub.s32 %v541, %v543
    %v545 = vrot.slane %v171, %v544
    %v547 = vunpack.c.l.s4 1987475062
    %v548 = vunpack.c.0.s8 %v547
    %v549 = vlaneseq
    %v550 = vshrl.u32 %v549, 7
    %v551 = vsub.s32 %v548, %v550
    %v552 = vrot.slane %v171, %v551
    %v554 = vunpack.c.l.s4 269488144
    %v555 = vunpack.c.0.s8 %v554
    %v556 = vlaneseq
    %v557 = vshrl.u32 %v556, 7
    %v558 = vsub.s32 %v555, %v557
    %v559 = vrot.slane %v174, %v558
    %v561 = vunpack.c.l.s4 842150450
    %v562 = vunpack.c.0.s8 %v561
    %v563 = vlaneseq
    %v564 = vshrl.u32 %v563, 7
    %v565 = vsub.s32 %v562, %v564
    %v566 = vrot.slane %v174, %v565
    %v568 = vunpack.c.l.s4 1414812756
    %v569 = vunpack.c.0.s8 %v568
    %v570 = vlaneseq
    %v571 = vshrl.u32 %v570, 7
    %v572 = vsub.s32 %v569, %v571
    %v573 = vrot.slane %v174, %v572
    %v575 = vunpack.c.l.s4 1987475062
    %v576 = vunpack.c.0.s8 %v575
    %v577 = vlaneseq
    %v578 = vshrl.u32 %v577, 7
    %v579 = vsub.s32 %v576, %v578
    %v580 = vrot.slane %v174, %v579
    %v582 = vunpack.c.l.s4 269488144
    %v583 = vunpack.c.0.s8 %v582
    %v584 = vlaneseq
    %v585 = vshrl.u32 %v584, 7
    %v586 = vsub.s32 %v583, %v585
    %v587 = vrot.slane %v177, %v586
    %v589 = vunpack.c.l.s4 842150450
    %v590 = vunpack.c.0.s8 %v589
    %v591 = vlaneseq
    %v592 = vshrl.u32 %v591, 7
    %v593 = vsub.s32 %v590, %v592
    %v594 = vrot.slane %v177, %v593
    %v596 = vunpack.c.l.s4 1414812756
    %v597 = vunpack.c.0.s8 %v596
    %v598 = vlaneseq
    %v599 = vshrl.u32 %v598, 7
    %v600 = vsub.s32 %v597, %v599
    %v601 = vrot.slane %v177, %v600
    %v603 = vunpack.c.l.s4 1987475062
    %v604 = vunpack.c.0.s8 %v603
    %v605 = vlaneseq
    %v606 = vshrl.u32 %v605, 7
    %v607 = vsub.s32 %v604, %v606
    %v608 = vrot.slane %v177, %v607
    %v610 = vunpack.c.l.s4 269488144
    %v611 = vunpack.c.0.s8 %v610
    %v612 = vlaneseq
    %v613 = vshrl.u32 %v612, 7
    %v614 = vsub.s32 %v611, %v613
    %v615 = vrot.slane %v180, %v614
    %v617 = vunpack.c.l.s4 842150450
    %v618 = vunpack.c.0.s8 %v617
    %v619 = vlaneseq
    %v620 = vshrl.u32 %v619, 7
    %v621 = vsub.s32 %v618, %v620
    %v622 = vrot.slane %v180, %v621
    %v624 = vunpack.c.l.s4 1414812756
    %v625 = vunpack.c.0.s8 %v624
    %v626 = vlaneseq
    %v627 = vshrl.u32 %v626, 7
    %v628 = vsub.s32 %v625, %v627
    %v629 = vrot.slane %v180, %v628
    %v631 = vunpack.c.l.s4 1987475062
    %v632 = vunpack.c.0.s8 %v631
    %v633 = vlaneseq
    %v634 = vshrl.u32 %v633, 7
    %v635 = vsub.s32 %v632, %v634
    %v636 = vrot.slane %v180, %v635
    %v638 = vunpack.c.l.s4 269488144
    %v639 = vunpack.c.0.s8 %v638
    %v640 = vlaneseq
    %v641 = vshrl.u32 %v640, 7
    %v642 = vsub.s32 %v639, %v641
    %v643 = vrot.slane %v183, %v642
    %v645 = vunpack.c.l.s4 842150450
    %v646 = vunpack.c.0.s8 %v645
    %v647 = vlaneseq
    %v648 = vshrl.u32 %v647, 7
    %v649 = vsub.s32 %v646, %v648
    %v650 = vrot.slane %v183, %v649
    %v652 = vunpack.c.l.s4 1414812756
    %v653 = vunpack.c.0.s8 %v652
    %v654 = vlaneseq
    %v655 = vshrl.u32 %v654, 7
    %v656 = vsub.s32 %v653, %v655
    %v657 = vrot.slane %v183, %v656
    %v659 = vunpack.c.l.s4 1987475062
    %v660 = vunpack.c.0.s8 %v659
    %v661 = vlaneseq
    %v662 = vshrl.u32 %v661, 7
    %v663 = vsub.s32 %v660, %v662
    %v664 = vrot.slane %v183, %v663
    %v666 = vunpack.c.l.s4 269488144
    %v667 = vunpack.c.0.s8 %v666
    %v668 = vlaneseq
    %v669 = vshrl.u32 %v668, 7
    %v670 = vsub.s32 %v667, %v669
    %v671 = vrot.slane %v186, %v670
    %v673 = vunpack.c.l.s4 842150450
    %v674 = vunpack.c.0.s8 %v673
    %v675 = vlaneseq
    %v676 = vshrl.u32 %v675, 7
    %v677 = vsub.s32 %v674, %v676
    %v678 = vrot.slane %v186, %v677
    %v680 = vunpack.c.l.s4 1414812756
    %v681 = vunpack.c.0.s8 %v680
    %v682 = vlaneseq
    %v683 = vshrl.u32 %v682, 7
    %v684 = vsub.s32 %v681, %v683
    %v685 = vrot.slane %v186, %v684
    %v687 = vunpack.c.l.s4 1987475062
    %v688 = vunpack.c.0.s8 %v687
    %v689 = vlaneseq
    %v690 = vshrl.u32 %v689, 7
    %v691 = vsub.s32 %v688, %v690
    %v692 = vrot.slane %v186, %v691
    %v694 = vunpack.c.l.s4 269488144
    %v695 = vunpack.c.0.s8 %v694
    %v696 = vlaneseq
    %v697 = vshrl.u32 %v696, 7
    %v698 = vsub.s32 %v695, %v697
    %v699 = vrot.slane %v189, %v698
    %v701 = vunpack.c.l.s4 842150450
    %v702 = vunpack.c.0.s8 %v701
    %v703 = vlaneseq
    %v704 = vshrl.u32 %v703, 7
    %v705 = vsub.s32 %v702, %v704
    %v706 = vrot.slane %v189, %v705
    %v708 = vunpack.c.l.s4 1414812756
    %v709 = vunpack.c.0.s8 %v708
    %v710 = vlaneseq
    %v711 = vshrl.u32 %v710, 7
    %v712 = vsub.s32 %v709, %v711
    %v713 = vrot.slane %v189, %v712
    %v715 = vunpack.c.l.s4 1987475062
    %v716 = vunpack.c.0.s8 %v715
    %v717 = vlaneseq
    %v718 = vshrl.u32 %v717, 7
    %v719 = vsub.s32 %v716, %v718
    %v720 = vrot.slane %v189, %v719
    %v722 = vunpack.c.l.s4 269488144
    %v723 = vunpack.c.0.s8 %v722
    %v724 = vlaneseq
    %v725 = vshrl.u32 %v724, 7
    %v726 = vsub.s32 %v723, %v725
    %v727 = vrot.slane %v192, %v726
    %v729 = vunpack.c.l.s4 842150450
    %v730 = vunpack.c.0.s8 %v729
    %v731 = vlaneseq
    %v732 = vshrl.u32 %v731, 7
    %v733 = vsub.s32 %v730, %v732
    %v734 = vrot.slane %v192, %v733
    %v736 = vunpack.c.l.s4 1414812756
    %v737 = vunpack.c.0.s8 %v736
    %v738 = vlaneseq
    %v739 = vshrl.u32 %v738, 7
    %v740 = vsub.s32 %v737, %v739
    %v741 = vrot.slane %v192, %v740
    %v743 = vunpack.c.l.s4 1987475062
    %v744 = vunpack.c.0.s8 %v743
    %v745 = vlaneseq
    %v746 = vshrl.u32 %v745, 7
    %v747 = vsub.s32 %v744, %v746
    %v748 = vrot.slane %v192, %v747
    %v750 = vunpack.c.l.s4 269488144
    %v751 = vunpack.c.0.s8 %v750
    %v752 = vlaneseq
    %v753 = vshrl.u32 %v752, 7
    %v754 = vsub.s32 %v751, %v753
    %v755 = vrot.slane %v195, %v754
    %v757 = vunpack.c.l.s4 842150450
    %v758 = vunpack.c.0.s8 %v757
    %v759 = vlaneseq
    %v760 = vshrl.u32 %v759, 7
    %v761 = vsub.s32 %v758, %v760
    %v762 = vrot.slane %v195, %v761
    %v764 = vunpack.c.l.s4 1414812756
    %v765 = vunpack.c.0.s8 %v764
    %v766 = vlaneseq
    %v767 = vshrl.u32 %v766, 7
    %v768 = vsub.s32 %v765, %v767
    %v769 = vrot.slane %v195, %v768
    %v771 = vunpack.c.l.s4 1987475062
    %v772 = vunpack.c.0.s8 %v771
    %v773 = vlaneseq
    %v774 = vshrl.u32 %v773, 7
    %v775 = vsub.s32 %v772, %v774
    %v776 = vrot.slane %v195, %v775
    %v778 = vunpack.c.l.s4 269488144
    %v779 = vunpack.c.0.s8 %v778
    %v780 = vlaneseq
    %v781 = vshrl.u32 %v780, 7
    %v782 = vsub.s32 %v779, %v781
    %v783 = vrot.slane %v198, %v782
    %v785 = vunpack.c.l.s4 842150450
    %v786 = vunpack.c.0.s8 %v785
    %v787 = vlaneseq
    %v788 = vshrl.u32 %v787, 7
    %v789 = vsub.s32 %v786, %v788
    %v790 = vrot.slane %v198, %v789
    %v792 = vunpack.c.l.s4 1414812756
    %v793 = vunpack.c.0.s8 %v792
    %v794 = vlaneseq
    %v795 = vshrl.u32 %v794, 7
    %v796 = vsub.s32 %v793, %v795
    %v797 = vrot.slane %v198, %v796
    %v799 = vunpack.c.l.s4 1987475062
    %v800 = vunpack.c.0.s8 %v799
    %v801 = vlaneseq
    %v802 = vshrl.u32 %v801, 7
    %v803 = vsub.s32 %v800, %v802
    %v804 = vrot.slane %v198, %v803
    %v806 = vunpack.c.l.s4 269488144
    %v807 = vunpack.c.0.s8 %v806
    %v808 = vlaneseq
    %v809 = vshrl.u32 %v808, 7
    %v810 = vsub.s32 %v807, %v809
    %v811 = vrot.slane %v201, %v810
    %v813 = vunpack.c.l.s4 842150450
    %v814 = vunpack.c.0.s8 %v813
    %v815 = vlaneseq
    %v816 = vshrl.u32 %v815, 7
    %v817 = vsub.s32 %v814, %v816
    %v818 = vrot.slane %v201, %v817
    %v820 = vunpack.c.l.s4 1414812756
    %v821 = vunpack.c.0.s8 %v820
    %v822 = vlaneseq
    %v823 = vshrl.u32 %v822, 7
    %v824 = vsub.s32 %v821, %v823
    %v825 = vrot.slane %v201, %v824
    %v827 = vunpack.c.l.s4 1987475062
    %v828 = vunpack.c.0.s8 %v827
    %v829 = vlaneseq
    %v830 = vshrl.u32 %v829, 7
    %v831 = vsub.s32 %v828, %v830
    %v832 = vrot.slane %v201, %v831
    %v834 = vunpack.c.l.s4 269488144
    %v835 = vunpack.c.0.s8 %v834
    %v836 = vlaneseq
    %v837 = vshrl.u32 %v836, 7
    %v838 = vsub.s32 %v835, %v837
    %v839 = vrot.slane %v204, %v838
    %v841 = vunpack.c.l.s4 842150450
    %v842 = vunpack.c.0.s8 %v841
    %v843 = vlaneseq
    %v844 = vshrl.u32 %v843, 7
    %v845 = vsub.s32 %v842, %v844
    %v846 = vrot.slane %v204, %v845
    %v848 = vunpack.c.l.s4 1414812756
    %v849 = vunpack.c.0.s8 %v848
    %v850 = vlaneseq
    %v851 = vshrl.u32 %v850, 7
    %v852 = vsub.s32 %v849, %v851
    %v853 = vrot.slane %v204, %v852
    %v855 = vunpack.c.l.s4 1987475062
    %v856 = vunpack.c.0.s8 %v855
    %v857 = vlaneseq
    %v858 = vshrl.u32 %v857, 7
    %v859 = vsub.s32 %v856, %v858
    %v860 = vrot.slane %v204, %v859
    %v862 = vunpack.c.l.s4 269488144
    %v863 = vunpack.c.0.s8 %v862
    %v864 = vlaneseq
    %v865 = vshrl.u32 %v864, 7
    %v866 = vsub.s32 %v863, %v865
    %v867 = vrot.slane %v207, %v866
    %v869 = vunpack.c.l.s4 842150450
    %v870 = vunpack.c.0.s8 %v869
    %v871 = vlaneseq
    %v872 = vshrl.u32 %v871, 7
    %v873 = vsub.s32 %v870, %v872
    %v874 = vrot.slane %v207, %v873
    %v876 = vunpack.c.l.s4 1414812756
    %v877 = vunpack.c.0.s8 %v876
    %v878 = vlaneseq
    %v879 = vshrl.u32 %v878, 7
    %v880 = vsub.s32 %v877, %v879
    %v881 = vrot.slane %v207, %v880
    %v883 = vunpack.c.l.s4 1987475062
    %v884 = vunpack.c.0.s8 %v883
    %v885 = vlaneseq
    %v886 = vshrl.u32 %v885, 7
    %v887 = vsub.s32 %v884, %v886
    %v888 = vrot.slane %v207, %v887
    %v890 = vunpack.c.l.s4 269488144
    %v891 = vunpack.c.0.s8 %v890
    %v892 = vlaneseq
    %v893 = vshrl.u32 %v892, 7
    %v894 = vsub.s32 %v891, %v893
    %v895 = vrot.slane %v210, %v894
    %v897 = vunpack.c.l.s4 842150450
    %v898 = vunpack.c.0.s8 %v897
    %v899 = vlaneseq
    %v900 = vshrl.u32 %v899, 7
    %v901 = vsub.s32 %v898, %v900
    %v902 = vrot.slane %v210, %v901
    %v904 = vunpack.c.l.s4 1414812756
    %v905 = vunpack.c.0.s8 %v904
    %v906 = vlaneseq
    %v907 = vshrl.u32 %v906, 7
    %v908 = vsub.s32 %v905, %v907
    %v909 = vrot.slane %v210, %v908
    %v911 = vunpack.c.l.s4 1987475062
    %v912 = vunpack.c.0.s8 %v911
    %v913 = vlaneseq
    %v914 = vshrl.u32 %v913, 7
    %v915 = vsub.s32 %v912, %v914
    %v916 = vrot.slane %v210, %v915
    %v918 = vunpack.c.l.s4 269488144
    %v919 = vunpack.c.0.s8 %v918
    %v920 = vlaneseq
    %v921 = vshrl.u32 %v920, 7
    %v922 = vsub.s32 %v919, %v921
    %v923 = vrot.slane %v213, %v922
    %v925 = vunpack.c.l.s4 842150450
    %v926 = vunpack.c.0.s8 %v925
    %v927 = vlaneseq
    %v928 = vshrl.u32 %v927, 7
    %v929 = vsub.s32 %v926, %v928
    %v930 = vrot.slane %v213, %v929
    %v932 = vunpack.c.l.s4 1414812756
    %v933 = vunpack.c.0.s8 %v932
    %v934 = vlaneseq
    %v935 = vshrl.u32 %v934, 7
    %v936 = vsub.s32 %v933, %v935
    %v937 = vrot.slane %v213, %v936
    %v939 = vunpack.c.l.s4 1987475062
    %v940 = vunpack.c.0.s8 %v939
    %v941 = vlaneseq
    %v942 = vshrl.u32 %v941, 7
    %v943 = vsub.s32 %v940, %v942
    %v944 = vrot.slane %v213, %v943
    %v946 = vunpack.c.l.s4 269488144
    %v947 = vunpack.c.0.s8 %v946
    %v948 = vlaneseq
    %v949 = vshrl.u32 %v948, 7
    %v950 = vsub.s32 %v947, %v949
    %v951 = vrot.slane %v216, %v950
    %v953 = vunpack.c.l.s4 842150450
    %v954 = vunpack.c.0.s8 %v953
    %v955 = vlaneseq
    %v956 = vshrl.u32 %v955, 7
    %v957 = vsub.s32 %v954, %v956
    %v958 = vrot.slane %v216, %v957
    %v960 = vunpack.c.l.s4 1414812756
    %v961 = vunpack.c.0.s8 %v960
    %v962 = vlaneseq
    %v963 = vshrl.u32 %v962, 7
    %v964 = vsub.s32 %v961, %v963
    %v965 = vrot.slane %v216, %v964
    %v967 = vunpack.c.l.s4 1987475062
    %v968 = vunpack.c.0.s8 %v967
    %v969 = vlaneseq
    %v970 = vshrl.u32 %v969, 7
    %v971 = vsub.s32 %v968, %v970
    %v972 = vrot.slane %v216, %v971
    %v974 = vunpack.c.l.s4 269488144
    %v975 = vunpack.c.0.s8 %v974
    %v976 = vlaneseq
    %v977 = vshrl.u32 %v976, 7
    %v978 = vsub.s32 %v975, %v977
    %v979 = vrot.slane %v219, %v978
    %v981 = vunpack.c.l.s4 842150450
    %v982 = vunpack.c.0.s8 %v981
    %v983 = vlaneseq
    %v984 = vshrl.u32 %v983, 7
    %v985 = vsub.s32 %v982, %v984
    %v986 = vrot.slane %v219, %v985
    %v988 = vunpack.c.l.s4 1414812756
    %v989 = vunpack.c.0.s8 %v988
    %v990 = vlaneseq
    %v991 = vshrl.u32 %v990, 7
    %v992 = vsub.s32 %v989, %v991
    %v993 = vrot.slane %v219, %v992
    %v995 = vunpack.c.l.s4 1987475062
    %v996 = vunpack.c.0.s8 %v995
    %v997 = vlaneseq
    %v998 = vshrl.u32 %v997, 7
    %v999 = vsub.s32 %v996, %v998
    %v1000 = vrot.slane %v219, %v999
    %v1002 = vunpack.c.l.s4 269488144
    %v1003 = vunpack.c.0.s8 %v1002
    %v1004 = vlaneseq
    %v1005 = vshrl.u32 %v1004, 7
    %v1006 = vsub.s32 %v1003, %v1005
    %v1007 = vrot.slane %v222, %v1006
    %v1009 = vunpack.c.l.s4 842150450
    %v1010 = vunpack.c.0.s8 %v1009
    %v1011 = vlaneseq
    %v1012 = vshrl.u32 %v1011, 7
    %v1013 = vsub.s32 %v1010, %v1012
    %v1014 = vrot.slane %v222, %v1013
    %v1016 = vunpack.c.l.s4 1414812756
    %v1017 = vunpack.c.0.s8 %v1016
    %v1018 = vlaneseq
    %v1019 = vshrl.u32 %v1018, 7
    %v1020 = vsub.s32 %v1017, %v1019
    %v1021 = vrot.slane %v222, %v1020
    %v1023 = vunpack.c.l.s4 1987475062
    %v1024 = vunpack.c.0.s8 %v1023
    %v1025 = vlaneseq
    %v1026 = vshrl.u32 %v1025, 7
    %v1027 = vsub.s32 %v1024, %v1026
    %v1028 = vrot.slane %v222, %v1027
    %v1030 = vunpack.c.l.s4 269488144
    %v1031 = vunpack.c.0.s8 %v1030
    %v1032 = vlaneseq
    %v1033 = vshrl.u32 %v1032, 7
    %v1034 = vsub.s32 %v1031, %v1033
    %v1035 = vrot.slane %v225, %v1034
    %v1037 = vunpack.c.l.s4 842150450
    %v1038 = vunpack.c.0.s8 %v1037
    %v1039 = vlaneseq
    %v1040 = vshrl.u32 %v1039, 7
    %v1041 = vsub.s32 %v1038, %v1040
    %v1042 = vrot.slane %v225, %v1041
    %v1044 = vunpack.c.l.s4 1414812756
    %v1045 = vunpack.c.0.s8 %v1044
    %v1046 = vlaneseq
    %v1047 = vshrl.u32 %v1046, 7
    %v1048 = vsub.s32 %v1045, %v1047
    %v1049 = vrot.slane %v225, %v1048
    %v1051 = vunpack.c.l.s4 1987475062
    %v1052 = vunpack.c.0.s8 %v1051
    %v1053 = vlaneseq
    %v1054 = vshrl.u32 %v1053, 7
    %v1055 = vsub.s32 %v1052, %v1054
    %v1056 = vrot.slane %v225, %v1055
    %v1058 = vunpack.c.l.s4 269488144
    %v1059 = vunpack.c.0.s8 %v1058
    %v1060 = vlaneseq
    %v1061 = vshrl.u32 %v1060, 7
    %v1062 = vsub.s32 %v1059, %v1061
    %v1063 = vrot.slane %v228, %v1062
    %v1065 = vunpack.c.l.s4 842150450
    %v1066 = vunpack.c.0.s8 %v1065
    %v1067 = vlaneseq
    %v1068 = vshrl.u32 %v1067, 7
    %v1069 = vsub.s32 %v1066, %v1068
    %v1070 = vrot.slane %v228, %v1069
    %v1072 = vunpack.c.l.s4 1414812756
    %v1073 = vunpack.c.0.s8 %v1072
    %v1074 = vlaneseq
    %v1075 = vshrl.u32 %v1074, 7
    %v1076 = vsub.s32 %v1073, %v1075
    %v1077 = vrot.slane %v228, %v1076
    %v1079 = vunpack.c.l.s4 1987475062
    %v1080 = vunpack.c.0.s8 %v1079
    %v1081 = vlaneseq
    %v1082 = vshrl.u32 %v1081, 7
    %v1083 = vsub.s32 %v1080, %v1082
    %v1084 = vrot.slane %v228, %v1083
    %v1086 = vunpack.c.l.s4 269488144
    %v1087 = vunpack.c.0.s8 %v1086
    %v1088 = vlaneseq
    %v1089 = vshrl.u32 %v1088, 7
    %v1090 = vsub.s32 %v1087, %v1089
    %v1091 = vrot.slane %v231, %v1090
    %v1093 = vunpack.c.l.s4 842150450
    %v1094 = vunpack.c.0.s8 %v1093
    %v1095 = vlaneseq
    %v1096 = vshrl.u32 %v1095, 7
    %v1097 = vsub.s32 %v1094, %v1096
    %v1098 = vrot.slane %v231, %v1097
    %v1100 = vunpack.c.l.s4 1414812756
    %v1101 = vunpack.c.0.s8 %v1100
    %v1102 = vlaneseq
    %v1103 = vshrl.u32 %v1102, 7
    %v1104 = vsub.s32 %v1101, %v1103
    %v1105 = vrot.slane %v231, %v1104
    %v1107 = vunpack.c.l.s4 1987475062
    %v1108 = vunpack.c.0.s8 %v1107
    %v1109 = vlaneseq
    %v1110 = vshrl.u32 %v1109, 7
    %v1111 = vsub.s32 %v1108, %v1110
    %v1112 = vrot.slane %v231, %v1111
    %v1114 = vunpack.c.l.s4 269488144
    %v1115 = vunpack.c.0.s8 %v1114
    %v1116 = vlaneseq
    %v1117 = vshrl.u32 %v1116, 7
    %v1118 = vsub.s32 %v1115, %v1117
    %v1119 = vrot.slane %v234, %v1118
    %v1121 = vunpack.c.l.s4 842150450
    %v1122 = vunpack.c.0.s8 %v1121
    %v1123 = vlaneseq
    %v1124 = vshrl.u32 %v1123, 7
    %v1125 = vsub.s32 %v1122, %v1124
    %v1126 = vrot.slane %v234, %v1125
    %v1128 = vunpack.c.l.s4 1414812756
    %v1129 = vunpack.c.0.s8 %v1128
    %v1130 = vlaneseq
    %v1131 = vshrl.u32 %v1130, 7
    %v1132 = vsub.s32 %v1129, %v1131
    %v1133 = vrot.slane %v234, %v1132
    %v1135 = vunpack.c.l.s4 1987475062
    %v1136 = vunpack.c.0.s8 %v1135
    %v1137 = vlaneseq
    %v1138 = vshrl.u32 %v1137, 7
    %v1139 = vsub.s32 %v1136, %v1138
    %v1140 = vrot.slane %v234, %v1139
    %v1142 = vunpack.c.l.s4 269488144
    %v1143 = vunpack.c.0.s8 %v1142
    %v1144 = vlaneseq
    %v1145 = vshrl.u32 %v1144, 7
    %v1146 = vsub.s32 %v1143, %v1145
    %v1147 = vrot.slane %v237, %v1146
    %v1149 = vunpack.c.l.s4 842150450
    %v1150 = vunpack.c.0.s8 %v1149
    %v1151 = vlaneseq
    %v1152 = vshrl.u32 %v1151, 7
    %v1153 = vsub.s32 %v1150, %v1152
    %v1154 = vrot.slane %v237, %v1153
    %v1156 = vunpack.c.l.s4 1414812756
    %v1157 = vunpack.c.0.s8 %v1156
    %v1158 = vlaneseq
    %v1159 = vshrl.u32 %v1158, 7
    %v1160 = vsub.s32 %v1157, %v1159
    %v1161 = vrot.slane %v237, %v1160
    %v1163 = vunpack.c.l.s4 1987475062
    %v1164 = vunpack.c.0.s8 %v1163
    %v1165 = vlaneseq
    %v1166 = vshrl.u32 %v1165, 7
    %v1167 = vsub.s32 %v1164, %v1166
    %v1168 = vrot.slane %v237, %v1167
    %v1170 = vunpack.c.l.s4 269488144
    %v1171 = vunpack.c.0.s8 %v1170
    %v1172 = vlaneseq
    %v1173 = vshrl.u32 %v1172, 7
    %v1174 = vsub.s32 %v1171, %v1173
    %v1175 = vrot.slane %v240, %v1174
    %v1177 = vunpack.c.l.s4 842150450
    %v1178 = vunpack.c.0.s8 %v1177
    %v1179 = vlaneseq
    %v1180 = vshrl.u32 %v1179, 7
    %v1181 = vsub.s32 %v1178, %v1180
    %v1182 = vrot.slane %v240, %v1181
    %v1184 = vunpack.c.l.s4 1414812756
    %v1185 = vunpack.c.0.s8 %v1184
    %v1186 = vlaneseq
    %v1187 = vshrl.u32 %v1186, 7
    %v1188 = vsub.s32 %v1185, %v1187
    %v1189 = vrot.slane %v240, %v1188
    %v1191 = vunpack.c.l.s4 1987475062
    %v1192 = vunpack.c.0.s8 %v1191
    %v1193 = vlaneseq
    %v1194 = vshrl.u32 %v1193, 7
    %v1195 = vsub.s32 %v1192, %v1194
    %v1196 = vrot.slane %v240, %v1195
    %v1198 = vunpack.c.l.s4 269488144
    %v1199 = vunpack.c.0.s8 %v1198
    %v1200 = vlaneseq
    %v1201 = vshrl.u32 %v1200, 7
    %v1202 = vsub.s32 %v1199, %v1201
    %v1203 = vrot.slane %v243, %v1202
    %v1205 = vunpack.c.l.s4 842150450
    %v1206 = vunpack.c.0.s8 %v1205
    %v1207 = vlaneseq
    %v1208 = vshrl.u32 %v1207, 7
    %v1209 = vsub.s32 %v1206, %v1208
    %v1210 = vrot.slane %v243, %v1209
    %v1212 = vunpack.c.l.s4 1414812756
    %v1213 = vunpack.c.0.s8 %v1212
    %v1214 = vlaneseq
    %v1215 = vshrl.u32 %v1214, 7
    %v1216 = vsub.s32 %v1213, %v1215
    %v1217 = vrot.slane %v243, %v1216
    %v1219 = vunpack.c.l.s4 1987475062
    %v1220 = vunpack.c.0.s8 %v1219
    %v1221 = vlaneseq
    %v1222 = vshrl.u32 %v1221, 7
    %v1223 = vsub.s32 %v1220, %v1222
    %v1224 = vrot.slane %v243, %v1223
    %v1226 = vunpack.c.l.s4 269488144
    %v1227 = vunpack.c.0.s8 %v1226
    %v1228 = vlaneseq
    %v1229 = vshrl.u32 %v1228, 7
    %v1230 = vsub.s32 %v1227, %v1229
    %v1231 = vrot.slane %v246, %v1230
    %v1233 = vunpack.c.l.s4 842150450
    %v1234 = vunpack.c.0.s8 %v1233
    %v1235 = vlaneseq
    %v1236 = vshrl.u32 %v1235, 7
    %v1237 = vsub.s32 %v1234, %v1236
    %v1238 = vrot.slane %v246, %v1237
    %v1240 = vunpack.c.l.s4 1414812756
    %v1241 = vunpack.c.0.s8 %v1240
    %v1242 = vlaneseq
    %v1243 = vshrl.u32 %v1242, 7
    %v1244 = vsub.s32 %v1241, %v1243
    %v1245 = vrot.slane %v246, %v1244
    %v1247 = vunpack.c.l.s4 1987475062
    %v1248 = vunpack.c.0.s8 %v1247
    %v1249 = vlaneseq
    %v1250 = vshrl.u32 %v1249, 7
    %v1251 = vsub.s32 %v1248, %v1250
    %v1252 = vrot.slane %v246, %v1251
    %v1254 = vunpack.c.l.s4 269488144
    %v1255 = vunpack.c.0.s8 %v1254
    %v1256 = vlaneseq
    %v1257 = vshrl.u32 %v1256, 7
    %v1258 = vsub.s32 %v1255, %v1257
    %v1259 = vrot.slane %v249, %v1258
    %v1261 = vunpack.c.l.s4 842150450
    %v1262 = vunpack.c.0.s8 %v1261
    %v1263 = vlaneseq
    %v1264 = vshrl.u32 %v1263, 7
    %v1265 = vsub.s32 %v1262, %v1264
    %v1266 = vrot.slane %v249, %v1265
    %v1268 = vunpack.c.l.s4 1414812756
    %v1269 = vunpack.c.0.s8 %v1268
    %v1270 = vlaneseq
    %v1271 = vshrl.u32 %v1270, 7
    %v1272 = vsub.s32 %v1269, %v1271
    %v1273 = vrot.slane %v249, %v1272
    %v1275 = vunpack.c.l.s4 1987475062
    %v1276 = vunpack.c.0.s8 %v1275
    %v1277 = vlaneseq
    %v1278 = vshrl.u32 %v1277, 7
    %v1279 = vsub.s32 %v1276, %v1278
    %v1280 = vrot.slane %v249, %v1279
    %v1282 = vunpack.c.l.s4 269488144
    %v1283 = vunpack.c.0.s8 %v1282
    %v1284 = vlaneseq
    %v1285 = vshrl.u32 %v1284, 7
    %v1286 = vsub.s32 %v1283, %v1285
    %v1287 = vrot.slane %v252, %v1286
    %v1289 = vunpack.c.l.s4 842150450
    %v1290 = vunpack.c.0.s8 %v1289
    %v1291 = vlaneseq
    %v1292 = vshrl.u32 %v1291, 7
    %v1293 = vsub.s32 %v1290, %v1292
    %v1294 = vrot.slane %v252, %v1293
    %v1296 = vunpack.c.l.s4 1414812756
    %v1297 = vunpack.c.0.s8 %v1296
    %v1298 = vlaneseq
    %v1299 = vshrl.u32 %v1298, 7
    %v1300 = vsub.s32 %v1297, %v1299
    %v1301 = vrot.slane %v252, %v1300
    %v1303 = vunpack.c.l.s4 1987475062
    %v1304 = vunpack.c.0.s8 %v1303
    %v1305 = vlaneseq
    %v1306 = vshrl.u32 %v1305, 7
    %v1307 = vsub.s32 %v1304, %v1306
    %v1308 = vrot.slane %v252, %v1307
    %v1310 = vunpack.c.l.s4 269488144
    %v1311 = vunpack.c.0.s8 %v1310
    %v1312 = vlaneseq
    %v1313 = vshrl.u32 %v1312, 7
    %v1314 = vsub.s32 %v1311, %v1313
    %v1315 = vrot.slane %v255, %v1314
    %v1317 = vunpack.c.l.s4 842150450
    %v1318 = vunpack.c.0.s8 %v1317
    %v1319 = vlaneseq
    %v1320 = vshrl.u32 %v1319, 7
    %v1321 = vsub.s32 %v1318, %v1320
    %v1322 = vrot.slane %v255, %v1321
    %v1324 = vunpack.c.l.s4 1414812756
    %v1325 = vunpack.c.0.s8 %v1324
    %v1326 = vlaneseq
    %v1327 = vshrl.u32 %v1326, 7
    %v1328 = vsub.s32 %v1325, %v1327
    %v1329 = vrot.slane %v255, %v1328
    %v1331 = vunpack.c.l.s4 1987475062
    %v1332 = vunpack.c.0.s8 %v1331
    %v1333 = vlaneseq
    %v1334 = vshrl.u32 %v1333, 7
    %v1335 = vsub.s32 %v1332, %v1334
    %v1336 = vrot.slane %v255, %v1335
    %v1338 = vunpack.c.l.s4 269488144
    %v1339 = vunpack.c.0.s8 %v1338
    %v1340 = vlaneseq
    %v1341 = vshrl.u32 %v1340, 7
    %v1342 = vsub.s32 %v1339, %v1341
    %v1343 = vrot.slane %v258, %v1342
    %v1345 = vunpack.c.l.s4 842150450
    %v1346 = vunpack.c.0.s8 %v1345
    %v1347 = vlaneseq
    %v1348 = vshrl.u32 %v1347, 7
    %v1349 = vsub.s32 %v1346, %v1348
    %v1350 = vrot.slane %v258, %v1349
    %v1352 = vunpack.c.l.s4 1414812756
    %v1353 = vunpack.c.0.s8 %v1352
    %v1354 = vlaneseq
    %v1355 = vshrl.u32 %v1354, 7
    %v1356 = vsub.s32 %v1353, %v1355
    %v1357 = vrot.slane %v258, %v1356
    %v1359 = vunpack.c.l.s4 1987475062
    %v1360 = vunpack.c.0.s8 %v1359
    %v1361 = vlaneseq
    %v1362 = vshrl.u32 %v1361, 7
    %v1363 = vsub.s32 %v1360, %v1362
    %v1364 = vrot.slane %v258, %v1363
    %v1366 = vunpack.c.l.s4 269488144
    %v1367 = vunpack.c.0.s8 %v1366
    %v1368 = vlaneseq
    %v1369 = vshrl.u32 %v1368, 7
    %v1370 = vsub.s32 %v1367, %v1369
    %v1371 = vrot.slane %v261, %v1370
    %v1373 = vunpack.c.l.s4 842150450
    %v1374 = vunpack.c.0.s8 %v1373
    %v1375 = vlaneseq
    %v1376 = vshrl.u32 %v1375, 7
    %v1377 = vsub.s32 %v1374, %v1376
    %v1378 = vrot.slane %v261, %v1377
    %v1380 = vunpack.c.l.s4 1414812756
    %v1381 = vunpack.c.0.s8 %v1380
    %v1382 = vlaneseq
    %v1383 = vshrl.u32 %v1382, 7
    %v1384 = vsub.s32 %v1381, %v1383
    %v1385 = vrot.slane %v261, %v1384
    %v1387 = vunpack.c.l.s4 1987475062
    %v1388 = vunpack.c.0.s8 %v1387
    %v1389 = vlaneseq
    %v1390 = vshrl.u32 %v1389, 7
    %v1391 = vsub.s32 %v1388, %v1390
    %v1392 = vrot.slane %v261, %v1391
    %v1394 = vunpack.c.l.s4 269488144
    %v1395 = vunpack.c.0.s8 %v1394
    %v1396 = vlaneseq
    %v1397 = vshrl.u32 %v1396, 7
    %v1398 = vsub.s32 %v1395, %v1397
    %v1399 = vrot.slane %v264, %v1398
    %v1401 = vunpack.c.l.s4 842150450
    %v1402 = vunpack.c.0.s8 %v1401
    %v1403 = vlaneseq
    %v1404 = vshrl.u32 %v1403, 7
    %v1405 = vsub.s32 %v1402, %v1404
    %v1406 = vrot.slane %v264, %v1405
    %v1408 = vunpack.c.l.s4 1414812756
    %v1409 = vunpack.c.0.s8 %v1408
    %v1410 = vlaneseq
    %v1411 = vshrl.u32 %v1410, 7
    %v1412 = vsub.s32 %v1409, %v1411
    %v1413 = vrot.slane %v264, %v1412
    %v1415 = vunpack.c.l.s4 1987475062
    %v1416 = vunpack.c.0.s8 %v1415
    %v1417 = vlaneseq
    %v1418 = vshrl.u32 %v1417, 7
    %v1419 = vsub.s32 %v1416, %v1418
    %v1420 = vrot.slane %v264, %v1419
    %v1422 = vunpack.c.l.s4 269488144
    %v1423 = vunpack.c.0.s8 %v1422
    %v1424 = vlaneseq
    %v1425 = vshrl.u32 %v1424, 7
    %v1426 = vsub.s32 %v1423, %v1425
    %v1427 = vrot.slane %v267, %v1426
    %v1429 = vunpack.c.l.s4 842150450
    %v1430 = vunpack.c.0.s8 %v1429
    %v1431 = vlaneseq
    %v1432 = vshrl.u32 %v1431, 7
    %v1433 = vsub.s32 %v1430, %v1432
    %v1434 = vrot.slane %v267, %v1433
    %v1436 = vunpack.c.l.s4 1414812756
    %v1437 = vunpack.c.0.s8 %v1436
    %v1438 = vlaneseq
    %v1439 = vshrl.u32 %v1438, 7
    %v1440 = vsub.s32 %v1437, %v1439
    %v1441 = vrot.slane %v267, %v1440
    %v1443 = vunpack.c.l.s4 1987475062
    %v1444 = vunpack.c.0.s8 %v1443
    %v1445 = vlaneseq
    %v1446 = vshrl.u32 %v1445, 7
    %v1447 = vsub.s32 %v1444, %v1446
    %v1448 = vrot.slane %v267, %v1447
    %v1450 = vunpack.c.l.s4 269488144
    %v1451 = vunpack.c.0.s8 %v1450
    %v1452 = vlaneseq
    %v1453 = vshrl.u32 %v1452, 7
    %v1454 = vsub.s32 %v1451, %v1453
    %v1455 = vrot.slane %v270, %v1454
    %v1457 = vunpack.c.l.s4 842150450
    %v1458 = vunpack.c.0.s8 %v1457
    %v1459 = vlaneseq
    %v1460 = vshrl.u32 %v1459, 7
    %v1461 = vsub.s32 %v1458, %v1460
    %v1462 = vrot.slane %v270, %v1461
    %v1464 = vunpack.c.l.s4 1414812756
    %v1465 = vunpack.c.0.s8 %v1464
    %v1466 = vlaneseq
    %v1467 = vshrl.u32 %v1466, 7
    %v1468 = vsub.s32 %v1465, %v1467
    %v1469 = vrot.slane %v270, %v1468
    %v1471 = vunpack.c.l.s4 1987475062
    %v1472 = vunpack.c.0.s8 %v1471
    %v1473 = vlaneseq
    %v1474 = vshrl.u32 %v1473, 7
    %v1475 = vsub.s32 %v1472, %v1474
    %v1476 = vrot.slane %v270, %v1475
    %v1478 = vunpack.c.l.s4 269488144
    %v1479 = vunpack.c.0.s8 %v1478
    %v1480 = vlaneseq
    %v1481 = vshrl.u32 %v1480, 7
    %v1482 = vsub.s32 %v1479, %v1481
    %v1483 = vrot.slane %v273, %v1482
    %v1485 = vunpack.c.l.s4 842150450
    %v1486 = vunpack.c.0.s8 %v1485
    %v1487 = vlaneseq
    %v1488 = vshrl.u32 %v1487, 7
    %v1489 = vsub.s32 %v1486, %v1488
    %v1490 = vrot.slane %v273, %v1489
    %v1492 = vunpack.c.l.s4 1414812756
    %v1493 = vunpack.c.0.s8 %v1492
    %v1494 = vlaneseq
    %v1495 = vshrl.u32 %v1494, 7
    %v1496 = vsub.s32 %v1493, %v1495
    %v1497 = vrot.slane %v273, %v1496
    %v1499 = vunpack.c.l.s4 1987475062
    %v1500 = vunpack.c.0.s8 %v1499
    %v1501 = vlaneseq
    %v1502 = vshrl.u32 %v1501, 7
    %v1503 = vsub.s32 %v1500, %v1502
    %v1504 = vrot.slane %v273, %v1503
    %v1506 = vunpack.c.l.s4 269488144
    %v1507 = vunpack.c.0.s8 %v1506
    %v1508 = vlaneseq
    %v1509 = vshrl.u32 %v1508, 7
    %v1510 = vsub.s32 %v1507, %v1509
    %v1511 = vrot.slane %v276, %v1510
    %v1513 = vunpack.c.l.s4 842150450
    %v1514 = vunpack.c.0.s8 %v1513
    %v1515 = vlaneseq
    %v1516 = vshrl.u32 %v1515, 7
    %v1517 = vsub.s32 %v1514, %v1516
    %v1518 = vrot.slane %v276, %v1517
    %v1520 = vunpack.c.l.s4 1414812756
    %v1521 = vunpack.c.0.s8 %v1520
    %v1522 = vlaneseq
    %v1523 = vshrl.u32 %v1522, 7
    %v1524 = vsub.s32 %v1521, %v1523
    %v1525 = vrot.slane %v276, %v1524
    %v1527 = vunpack.c.l.s4 1987475062
    %v1528 = vunpack.c.0.s8 %v1527
    %v1529 = vlaneseq
    %v1530 = vshrl.u32 %v1529, 7
    %v1531 = vsub.s32 %v1528, %v1530
    %v1532 = vrot.slane %v276, %v1531
    %v1534 = vunpack.c.l.s4 269488144
    %v1535 = vunpack.c.0.s8 %v1534
    %v1536 = vlaneseq
    %v1537 = vshrl.u32 %v1536, 7
    %v1538 = vsub.s32 %v1535, %v1537
    %v1539 = vrot.slane %v279, %v1538
    %v1541 = vunpack.c.l.s4 842150450
    %v1542 = vunpack.c.0.s8 %v1541
    %v1543 = vlaneseq
    %v1544 = vshrl.u32 %v1543, 7
    %v1545 = vsub.s32 %v1542, %v1544
    %v1546 = vrot.slane %v279, %v1545
    %v1548 = vunpack.c.l.s4 1414812756
    %v1549 = vunpack.c.0.s8 %v1548
    %v1550 = vlaneseq
    %v1551 = vshrl.u32 %v1550, 7
    %v1552 = vsub.s32 %v1549, %v1551
    %v1553 = vrot.slane %v279, %v1552
    %v1555 = vunpack.c.l.s4 1987475062
    %v1556 = vunpack.c.0.s8 %v1555
    %v1557 = vlaneseq
    %v1558 = vshrl.u32 %v1557, 7
    %v1559 = vsub.s32 %v1556, %v1558
    %v1560 = vrot.slane %v279, %v1559
    %v1562 = vunpack.c.l.s4 269488144
    %v1563 = vunpack.c.0.s8 %v1562
    %v1564 = vlaneseq
    %v1565 = vshrl.u32 %v1564, 7
    %v1566 = vsub.s32 %v1563, %v1565
    %v1567 = vrot.slane %v282, %v1566
    %v1569 = vunpack.c.l.s4 842150450
    %v1570 = vunpack.c.0.s8 %v1569
    %v1571 = vlaneseq
    %v1572 = vshrl.u32 %v1571, 7
    %v1573 = vsub.s32 %v1570, %v1572
    %v1574 = vrot.slane %v282, %v1573
    %v1576 = vunpack.c.l.s4 1414812756
    %v1577 = vunpack.c.0.s8 %v1576
    %v1578 = vlaneseq
    %v1579 = vshrl.u32 %v1578, 7
    %v1580 = vsub.s32 %v1577, %v1579
    %v1581 = vrot.slane %v282, %v1580
    %v1583 = vunpack.c.l.s4 1987475062
    %v1584 = vunpack.c.0.s8 %v1583
    %v1585 = vlaneseq
    %v1586 = vshrl.u32 %v1585, 7
    %v1587 = vsub.s32 %v1584, %v1586
    %v1588 = vrot.slane %v282, %v1587
    %v1590 = vunpack.c.l.s4 269488144
    %v1591 = vunpack.c.0.s8 %v1590
    %v1592 = vlaneseq
    %v1593 = vshrl.u32 %v1592, 7
    %v1594 = vsub.s32 %v1591, %v1593
    %v1595 = vrot.slane %v285, %v1594
    %v1597 = vunpack.c.l.s4 842150450
    %v1598 = vunpack.c.0.s8 %v1597
    %v1599 = vlaneseq
    %v1600 = vshrl.u32 %v1599, 7
    %v1601 = vsub.s32 %v1598, %v1600
    %v1602 = vrot.slane %v285, %v1601
    %v1604 = vunpack.c.l.s4 1414812756
    %v1605 = vunpack.c.0.s8 %v1604
    %v1606 = vlaneseq
    %v1607 = vshrl.u32 %v1606, 7
    %v1608 = vsub.s32 %v1605, %v1607
    %v1609 = vrot.slane %v285, %v1608
    %v1611 = vunpack.c.l.s4 1987475062
    %v1612 = vunpack.c.0.s8 %v1611
    %v1613 = vlaneseq
    %v1614 = vshrl.u32 %v1613, 7
    %v1615 = vsub.s32 %v1612, %v1614
    %v1616 = vrot.slane %v285, %v1615
    %v1618 = vunpack.c.l.s4 269488144
    %v1619 = vunpack.c.0.s8 %v1618
    %v1620 = vlaneseq
    %v1621 = vshrl.u32 %v1620, 7
    %v1622 = vsub.s32 %v1619, %v1621
    %v1623 = vrot.slane %v288, %v1622
    %v1625 = vunpack.c.l.s4 842150450
    %v1626 = vunpack.c.0.s8 %v1625
    %v1627 = vlaneseq
    %v1628 = vshrl.u32 %v1627, 7
    %v1629 = vsub.s32 %v1626, %v1628
    %v1630 = vrot.slane %v288, %v1629
    %v1632 = vunpack.c.l.s4 1414812756
    %v1633 = vunpack.c.0.s8 %v1632
    %v1634 = vlaneseq
    %v1635 = vshrl.u32 %v1634, 7
    %v1636 = vsub.s32 %v1633, %v1635
    %v1637 = vrot.slane %v288, %v1636
    %v1639 = vunpack.c.l.s4 1987475062
    %v1640 = vunpack.c.0.s8 %v1639
    %v1641 = vlaneseq
    %v1642 = vshrl.u32 %v1641, 7
    %v1643 = vsub.s32 %v1640, %v1642
    %v1644 = vrot.slane %v288, %v1643
    %v1646 = vunpack.c.l.s4 269488144
    %v1647 = vunpack.c.0.s8 %v1646
    %v1648 = vlaneseq
    %v1649 = vshrl.u32 %v1648, 7
    %v1650 = vsub.s32 %v1647, %v1649
    %v1651 = vrot.slane %v291, %v1650
    %v1653 = vunpack.c.l.s4 842150450
    %v1654 = vunpack.c.0.s8 %v1653
    %v1655 = vlaneseq
    %v1656 = vshrl.u32 %v1655, 7
    %v1657 = vsub.s32 %v1654, %v1656
    %v1658 = vrot.slane %v291, %v1657
    %v1660 = vunpack.c.l.s4 1414812756
    %v1661 = vunpack.c.0.s8 %v1660
    %v1662 = vlaneseq
    %v1663 = vshrl.u32 %v1662, 7
    %v1664 = vsub.s32 %v1661, %v1663
    %v1665 = vrot.slane %v291, %v1664
    %v1667 = vunpack.c.l.s4 1987475062
    %v1668 = vunpack.c.0.s8 %v1667
    %v1669 = vlaneseq
    %v1670 = vshrl.u32 %v1669, 7
    %v1671 = vsub.s32 %v1668, %v1670
    %v1672 = vrot.slane %v291, %v1671
    %v1674 = vunpack.c.l.s4 269488144
    %v1675 = vunpack.c.0.s8 %v1674
    %v1676 = vlaneseq
    %v1677 = vshrl.u32 %v1676, 7
    %v1678 = vsub.s32 %v1675, %v1677
    %v1679 = vrot.slane %v294, %v1678
    %v1681 = vunpack.c.l.s4 842150450
    %v1682 = vunpack.c.0.s8 %v1681
    %v1683 = vlaneseq
    %v1684 = vshrl.u32 %v1683, 7
    %v1685 = vsub.s32 %v1682, %v1684
    %v1686 = vrot.slane %v294, %v1685
    %v1688 = vunpack.c.l.s4 1414812756
    %v1689 = vunpack.c.0.s8 %v1688
    %v1690 = vlaneseq
    %v1691 = vshrl.u32 %v1690, 7
    %v1692 = vsub.s32 %v1689, %v1691
    %v1693 = vrot.slane %v294, %v1692
    %v1695 = vunpack.c.l.s4 1987475062
    %v1696 = vunpack.c.0.s8 %v1695
    %v1697 = vlaneseq
    %v1698 = vshrl.u32 %v1697, 7
    %v1699 = vsub.s32 %v1696, %v1698
    %v1700 = vrot.slane %v294, %v1699
    %v1702 = vunpack.c.l.s4 269488144
    %v1703 = vunpack.c.0.s8 %v1702
    %v1704 = vlaneseq
    %v1705 = vshrl.u32 %v1704, 7
    %v1706 = vsub.s32 %v1703, %v1705
    %v1707 = vrot.slane %v297, %v1706
    %v1709 = vunpack.c.l.s4 842150450
    %v1710 = vunpack.c.0.s8 %v1709
    %v1711 = vlaneseq
    %v1712 = vshrl.u32 %v1711, 7
    %v1713 = vsub.s32 %v1710, %v1712
    %v1714 = vrot.slane %v297, %v1713
    %v1716 = vunpack.c.l.s4 1414812756
    %v1717 = vunpack.c.0.s8 %v1716
    %v1718 = vlaneseq
    %v1719 = vshrl.u32 %v1718, 7
    %v1720 = vsub.s32 %v1717, %v1719
    %v1721 = vrot.slane %v297, %v1720
    %v1723 = vunpack.c.l.s4 1987475062
    %v1724 = vunpack.c.0.s8 %v1723
    %v1725 = vlaneseq
    %v1726 = vshrl.u32 %v1725, 7
    %v1727 = vsub.s32 %v1724, %v1726
    %v1728 = vrot.slane %v297, %v1727
    %v1730 = vunpack.c.l.s4 269488144
    %v1731 = vunpack.c.0.s8 %v1730
    %v1732 = vlaneseq
    %v1733 = vshrl.u32 %v1732, 7
    %v1734 = vsub.s32 %v1731, %v1733
    %v1735 = vrot.slane %v300, %v1734
    %v1737 = vunpack.c.l.s4 842150450
    %v1738 = vunpack.c.0.s8 %v1737
    %v1739 = vlaneseq
    %v1740 = vshrl.u32 %v1739, 7
    %v1741 = vsub.s32 %v1738, %v1740
    %v1742 = vrot.slane %v300, %v1741
    %v1744 = vunpack.c.l.s4 1414812756
    %v1745 = vunpack.c.0.s8 %v1744
    %v1746 = vlaneseq
    %v1747 = vshrl.u32 %v1746, 7
    %v1748 = vsub.s32 %v1745, %v1747
    %v1749 = vrot.slane %v300, %v1748
    %v1751 = vunpack.c.l.s4 1987475062
    %v1752 = vunpack.c.0.s8 %v1751
    %v1753 = vlaneseq
    %v1754 = vshrl.u32 %v1753, 7
    %v1755 = vsub.s32 %v1752, %v1754
    %v1756 = vrot.slane %v300, %v1755
    %v1758 = vunpack.c.l.s4 269488144
    %v1759 = vunpack.c.0.s8 %v1758
    %v1760 = vlaneseq
    %v1761 = vshrl.u32 %v1760, 7
    %v1762 = vsub.s32 %v1759, %v1761
    %v1763 = vrot.slane %v303, %v1762
    %v1765 = vunpack.c.l.s4 842150450
    %v1766 = vunpack.c.0.s8 %v1765
    %v1767 = vlaneseq
    %v1768 = vshrl.u32 %v1767, 7
    %v1769 = vsub.s32 %v1766, %v1768
    %v1770 = vrot.slane %v303, %v1769
    %v1772 = vunpack.c.l.s4 1414812756
    %v1773 = vunpack.c.0.s8 %v1772
    %v1774 = vlaneseq
    %v1775 = vshrl.u32 %v1774, 7
    %v1776 = vsub.s32 %v1773, %v1775
    %v1777 = vrot.slane %v303, %v1776
    %v1779 = vunpack.c.l.s4 1987475062
    %v1780 = vunpack.c.0.s8 %v1779
    %v1781 = vlaneseq
    %v1782 = vshrl.u32 %v1781, 7
    %v1783 = vsub.s32 %v1780, %v1782
    %v1784 = vrot.slane %v303, %v1783
    %v1786 = vunpack.c.l.s4 269488144
    %v1787 = vunpack.c.0.s8 %v1786
    %v1788 = vlaneseq
    %v1789 = vshrl.u32 %v1788, 7
    %v1790 = vsub.s32 %v1787, %v1789
    %v1791 = vrot.slane %v306, %v1790
    %v1793 = vunpack.c.l.s4 842150450
    %v1794 = vunpack.c.0.s8 %v1793
    %v1795 = vlaneseq
    %v1796 = vshrl.u32 %v1795, 7
    %v1797 = vsub.s32 %v1794, %v1796
    %v1798 = vrot.slane %v306, %v1797
    %v1800 = vunpack.c.l.s4 1414812756
    %v1801 = vunpack.c.0.s8 %v1800
    %v1802 = vlaneseq
    %v1803 = vshrl.u32 %v1802, 7
    %v1804 = vsub.s32 %v1801, %v1803
    %v1805 = vrot.slane %v306, %v1804
    %v1807 = vunpack.c.l.s4 1987475062
    %v1808 = vunpack.c.0.s8 %v1807
    %v1809 = vlaneseq
    %v1810 = vshrl.u32 %v1809, 7
    %v1811 = vsub.s32 %v1808, %v1810
    %v1812 = vrot.slane %v306, %v1811
    %v1814 = vunpack.c.l.s4 269488144
    %v1815 = vunpack.c.0.s8 %v1814
    %v1816 = vlaneseq
    %v1817 = vshrl.u32 %v1816, 7
    %v1818 = vsub.s32 %v1815, %v1817
    %v1819 = vrot.slane %v309, %v1818
    %v1821 = vunpack.c.l.s4 842150450
    %v1822 = vunpack.c.0.s8 %v1821
    %v1823 = vlaneseq
    %v1824 = vshrl.u32 %v1823, 7
    %v1825 = vsub.s32 %v1822, %v1824
    %v1826 = vrot.slane %v309, %v1825
    %v1828 = vunpack.c.l.s4 1414812756
    %v1829 = vunpack.c.0.s8 %v1828
    %v1830 = vlaneseq
    %v1831 = vshrl.u32 %v1830, 7
    %v1832 = vsub.s32 %v1829, %v1831
    %v1833 = vrot.slane %v309, %v1832
    %v1835 = vunpack.c.l.s4 1987475062
    %v1836 = vunpack.c.0.s8 %v1835
    %v1837 = vlaneseq
    %v1838 = vshrl.u32 %v1837, 7
    %v1839 = vsub.s32 %v1836, %v1838
    %v1840 = vrot.slane %v309, %v1839
    %v1842 = vunpack.c.l.s4 269488144
    %v1843 = vunpack.c.0.s8 %v1842
    %v1844 = vlaneseq
    %v1845 = vshrl.u32 %v1844, 7
    %v1846 = vsub.s32 %v1843, %v1845
    %v1847 = vrot.slane %v312, %v1846
    %v1849 = vunpack.c.l.s4 842150450
    %v1850 = vunpack.c.0.s8 %v1849
    %v1851 = vlaneseq
    %v1852 = vshrl.u32 %v1851, 7
    %v1853 = vsub.s32 %v1850, %v1852
    %v1854 = vrot.slane %v312, %v1853
    %v1856 = vunpack.c.l.s4 1414812756
    %v1857 = vunpack.c.0.s8 %v1856
    %v1858 = vlaneseq
    %v1859 = vshrl.u32 %v1858, 7
    %v1860 = vsub.s32 %v1857, %v1859
    %v1861 = vrot.slane %v312, %v1860
    %v1863 = vunpack.c.l.s4 1987475062
    %v1864 = vunpack.c.0.s8 %v1863
    %v1865 = vlaneseq
    %v1866 = vshrl.u32 %v1865, 7
    %v1867 = vsub.s32 %v1864, %v1866
    %v1868 = vrot.slane %v312, %v1867
    %v1870 = vunpack.c.l.s4 269488144
    %v1871 = vunpack.c.0.s8 %v1870
    %v1872 = vlaneseq
    %v1873 = vshrl.u32 %v1872, 7
    %v1874 = vsub.s32 %v1871, %v1873
    %v1875 = vrot.slane %v315, %v1874
    %v1877 = vunpack.c.l.s4 842150450
    %v1878 = vunpack.c.0.s8 %v1877
    %v1879 = vlaneseq
    %v1880 = vshrl.u32 %v1879, 7
    %v1881 = vsub.s32 %v1878, %v1880
    %v1882 = vrot.slane %v315, %v1881
    %v1884 = vunpack.c.l.s4 1414812756
    %v1885 = vunpack.c.0.s8 %v1884
    %v1886 = vlaneseq
    %v1887 = vshrl.u32 %v1886, 7
    %v1888 = vsub.s32 %v1885, %v1887
    %v1889 = vrot.slane %v315, %v1888
    %v1891 = vunpack.c.l.s4 1987475062
    %v1892 = vunpack.c.0.s8 %v1891
    %v1893 = vlaneseq
    %v1894 = vshrl.u32 %v1893, 7
    %v1895 = vsub.s32 %v1892, %v1894
    %v1896 = vrot.slane %v315, %v1895
    %v1898 = vunpack.c.l.s4 269488144
    %v1899 = vunpack.c.0.s8 %v1898
    %v1900 = vlaneseq
    %v1901 = vshrl.u32 %v1900, 7
    %v1902 = vsub.s32 %v1899, %v1901
    %v1903 = vrot.slane %v318, %v1902
    %v1905 = vunpack.c.l.s4 842150450
    %v1906 = vunpack.c.0.s8 %v1905
    %v1907 = vlaneseq
    %v1908 = vshrl.u32 %v1907, 7
    %v1909 = vsub.s32 %v1906, %v1908
    %v1910 = vrot.slane %v318, %v1909
    %v1912 = vunpack.c.l.s4 1414812756
    %v1913 = vunpack.c.0.s8 %v1912
    %v1914 = vlaneseq
    %v1915 = vshrl.u32 %v1914, 7
    %v1916 = vsub.s32 %v1913, %v1915
    %v1917 = vrot.slane %v318, %v1916
    %v1919 = vunpack.c.l.s4 1987475062
    %v1920 = vunpack.c.0.s8 %v1919
    %v1921 = vlaneseq
    %v1922 = vshrl.u32 %v1921, 7
    %v1923 = vsub.s32 %v1920, %v1922
    %v1924 = vrot.slane %v318, %v1923
    %v1926 = vunpack.c.l.s4 269488144
    %v1927 = vunpack.c.0.s8 %v1926
    %v1928 = vlaneseq
    %v1929 = vshrl.u32 %v1928, 7
    %v1930 = vsub.s32 %v1927, %v1929
    %v1931 = vrot.slane %v321, %v1930
    %v1933 = vunpack.c.l.s4 842150450
    %v1934 = vunpack.c.0.s8 %v1933
    %v1935 = vlaneseq
    %v1936 = vshrl.u32 %v1935, 7
    %v1937 = vsub.s32 %v1934, %v1936
    %v1938 = vrot.slane %v321, %v1937
    %v1940 = vunpack.c.l.s4 1414812756
    %v1941 = vunpack.c.0.s8 %v1940
    %v1942 = vlaneseq
    %v1943 = vshrl.u32 %v1942, 7
    %v1944 = vsub.s32 %v1941, %v1943
    %v1945 = vrot.slane %v321, %v1944
    %v1947 = vunpack.c.l.s4 1987475062
    %v1948 = vunpack.c.0.s8 %v1947
    %v1949 = vlaneseq
    %v1950 = vshrl.u32 %v1949, 7
    %v1951 = vsub.s32 %v1948, %v1950
    %v1952 = vrot.slane %v321, %v1951
    %v1954 = vunpack.c.l.s4 269488144
    %v1955 = vunpack.c.0.s8 %v1954
    %v1956 = vlaneseq
    %v1957 = vshrl.u32 %v1956, 7
    %v1958 = vsub.s32 %v1955, %v1957
    %v1959 = vrot.slane %v324, %v1958
    %v1961 = vunpack.c.l.s4 842150450
    %v1962 = vunpack.c.0.s8 %v1961
    %v1963 = vlaneseq
    %v1964 = vshrl.u32 %v1963, 7
    %v1965 = vsub.s32 %v1962, %v1964
    %v1966 = vrot.slane %v324, %v1965
    %v1968 = vunpack.c.l.s4 1414812756
    %v1969 = vunpack.c.0.s8 %v1968
    %v1970 = vlaneseq
    %v1971 = vshrl.u32 %v1970, 7
    %v1972 = vsub.s32 %v1969, %v1971
    %v1973 = vrot.slane %v324, %v1972
    %v1975 = vunpack.c.l.s4 1987475062
    %v1976 = vunpack.c.0.s8 %v1975
    %v1977 = vlaneseq
    %v1978 = vshrl.u32 %v1977, 7
    %v1979 = vsub.s32 %v1976, %v1978
    %v1980 = vrot.slane %v324, %v1979
    %v1982 = vunpack.c.l.s4 269488144
    %v1983 = vunpack.c.0.s8 %v1982
    %v1984 = vlaneseq
    %v1985 = vshrl.u32 %v1984, 7
    %v1986 = vsub.s32 %v1983, %v1985
    %v1987 = vrot.slane %v327, %v1986
    %v1989 = vunpack.c.l.s4 842150450
    %v1990 = vunpack.c.0.s8 %v1989
    %v1991 = vlaneseq
    %v1992 = vshrl.u32 %v1991, 7
    %v1993 = vsub.s32 %v1990, %v1992
    %v1994 = vrot.slane %v327, %v1993
    %v1996 = vunpack.c.l.s4 1414812756
    %v1997 = vunpack.c.0.s8 %v1996
    %v1998 = vlaneseq
    %v1999 = vshrl.u32 %v1998, 7
    %v2000 = vsub.s32 %v1997, %v1999
    %v2001 = vrot.slane %v327, %v2000
    %v2003 = vunpack.c.l.s4 1987475062
    %v2004 = vunpack.c.0.s8 %v2003
    %v2005 = vlaneseq
    %v2006 = vshrl.u32 %v2005, 7
    %v2007 = vsub.s32 %v2004, %v2006
    %v2008 = vrot.slane %v327, %v2007
    %v2010 = vunpack.c.l.s4 269488144
    %v2011 = vunpack.c.0.s8 %v2010
    %v2012 = vlaneseq
    %v2013 = vshrl.u32 %v2012, 7
    %v2014 = vsub.s32 %v2011, %v2013
    %v2015 = vrot.slane %v330, %v2014
    %v2017 = vunpack.c.l.s4 842150450
    %v2018 = vunpack.c.0.s8 %v2017
    %v2019 = vlaneseq
    %v2020 = vshrl.u32 %v2019, 7
    %v2021 = vsub.s32 %v2018, %v2020
    %v2022 = vrot.slane %v330, %v2021
    %v2024 = vunpack.c.l.s4 1414812756
    %v2025 = vunpack.c.0.s8 %v2024
    %v2026 = vlaneseq
    %v2027 = vshrl.u32 %v2026, 7
    %v2028 = vsub.s32 %v2025, %v2027
    %v2029 = vrot.slane %v330, %v2028
    %v2031 = vunpack.c.l.s4 1987475062
    %v2032 = vunpack.c.0.s8 %v2031
    %v2033 = vlaneseq
    %v2034 = vshrl.u32 %v2033, 7
    %v2035 = vsub.s32 %v2032, %v2034
    %v2036 = vrot.slane %v330, %v2035
    %v2038 = vunpack.c.l.s4 269488144
    %v2039 = vunpack.c.0.s8 %v2038
    %v2040 = vlaneseq
    %v2041 = vshrl.u32 %v2040, 7
    %v2042 = vsub.s32 %v2039, %v2041
    %v2043 = vrot.slane %v333, %v2042
    %v2045 = vunpack.c.l.s4 842150450
    %v2046 = vunpack.c.0.s8 %v2045
    %v2047 = vlaneseq
    %v2048 = vshrl.u32 %v2047, 7
    %v2049 = vsub.s32 %v2046, %v2048
    %v2050 = vrot.slane %v333, %v2049
    %v2052 = vunpack.c.l.s4 1414812756
    %v2053 = vunpack.c.0.s8 %v2052
    %v2054 = vlaneseq
    %v2055 = vshrl.u32 %v2054, 7
    %v2056 = vsub.s32 %v2053, %v2055
    %v2057 = vrot.slane %v333, %v2056
    %v2059 = vunpack.c.l.s4 1987475062
    %v2060 = vunpack.c.0.s8 %v2059
    %v2061 = vlaneseq
    %v2062 = vshrl.u32 %v2061, 7
    %v2063 = vsub.s32 %v2060, %v2062
    %v2064 = vrot.slane %v333, %v2063
    %v2066 = vunpack.c.l.s4 269488144
    %v2067 = vunpack.c.0.s8 %v2066
    %v2068 = vlaneseq
    %v2069 = vshrl.u32 %v2068, 7
    %v2070 = vsub.s32 %v2067, %v2069
    %v2071 = vrot.slane %v336, %v2070
    %v2073 = vunpack.c.l.s4 842150450
    %v2074 = vunpack.c.0.s8 %v2073
    %v2075 = vlaneseq
    %v2076 = vshrl.u32 %v2075, 7
    %v2077 = vsub.s32 %v2074, %v2076
    %v2078 = vrot.slane %v336, %v2077
    %v2080 = vunpack.c.l.s4 1414812756
    %v2081 = vunpack.c.0.s8 %v2080
    %v2082 = vlaneseq
    %v2083 = vshrl.u32 %v2082, 7
    %v2084 = vsub.s32 %v2081, %v2083
    %v2085 = vrot.slane %v336, %v2084
    %v2087 = vunpack.c.l.s4 1987475062
    %v2088 = vunpack.c.0.s8 %v2087
    %v2089 = vlaneseq
    %v2090 = vshrl.u32 %v2089, 7
    %v2091 = vsub.s32 %v2088, %v2090
    %v2092 = vrot.slane %v336, %v2091
    %v2094 = vunpack.c.l.s4 269488144
    %v2095 = vunpack.c.0.s8 %v2094
    %v2096 = vlaneseq
    %v2097 = vshrl.u32 %v2096, 7
    %v2098 = vsub.s32 %v2095, %v2097
    %v2099 = vrot.slane %v339, %v2098
    %v2101 = vunpack.c.l.s4 842150450
    %v2102 = vunpack.c.0.s8 %v2101
    %v2103 = vlaneseq
    %v2104 = vshrl.u32 %v2103, 7
    %v2105 = vsub.s32 %v2102, %v2104
    %v2106 = vrot.slane %v339, %v2105
    %v2108 = vunpack.c.l.s4 1414812756
    %v2109 = vunpack.c.0.s8 %v2108
    %v2110 = vlaneseq
    %v2111 = vshrl.u32 %v2110, 7
    %v2112 = vsub.s32 %v2109, %v2111
    %v2113 = vrot.slane %v339, %v2112
    %v2115 = vunpack.c.l.s4 1987475062
    %v2116 = vunpack.c.0.s8 %v2115
    %v2117 = vlaneseq
    %v2118 = vshrl.u32 %v2117, 7
    %v2119 = vsub.s32 %v2116, %v2118
    %v2120 = vrot.slane %v339, %v2119
    %v2122 = vunpack.c.l.s4 269488144
    %v2123 = vunpack.c.0.s8 %v2122
    %v2124 = vlaneseq
    %v2125 = vshrl.u32 %v2124, 7
    %v2126 = vsub.s32 %v2123, %v2125
    %v2127 = vrot.slane %v342, %v2126
    %v2129 = vunpack.c.l.s4 842150450
    %v2130 = vunpack.c.0.s8 %v2129
    %v2131 = vlaneseq
    %v2132 = vshrl.u32 %v2131, 7
    %v2133 = vsub.s32 %v2130, %v2132
    %v2134 = vrot.slane %v342, %v2133
    %v2136 = vunpack.c.l.s4 1414812756
    %v2137 = vunpack.c.0.s8 %v2136
    %v2138 = vlaneseq
    %v2139 = vshrl.u32 %v2138, 7
    %v2140 = vsub.s32 %v2137, %v2139
    %v2141 = vrot.slane %v342, %v2140
    %v2143 = vunpack.c.l.s4 1987475062
    %v2144 = vunpack.c.0.s8 %v2143
    %v2145 = vlaneseq
    %v2146 = vshrl.u32 %v2145, 7
    %v2147 = vsub.s32 %v2144, %v2146
    %v2148 = vrot.slane %v342, %v2147
    %v2150 = vunpack.c.l.s4 269488144
    %v2151 = vunpack.c.0.s8 %v2150
    %v2152 = vlaneseq
    %v2153 = vshrl.u32 %v2152, 7
    %v2154 = vsub.s32 %v2151, %v2153
    %v2155 = vrot.slane %v345, %v2154
    %v2157 = vunpack.c.l.s4 842150450
    %v2158 = vunpack.c.0.s8 %v2157
    %v2159 = vlaneseq
    %v2160 = vshrl.u32 %v2159, 7
    %v2161 = vsub.s32 %v2158, %v2160
    %v2162 = vrot.slane %v345, %v2161
    %v2164 = vunpack.c.l.s4 1414812756
    %v2165 = vunpack.c.0.s8 %v2164
    %v2166 = vlaneseq
    %v2167 = vshrl.u32 %v2166, 7
    %v2168 = vsub.s32 %v2165, %v2167
    %v2169 = vrot.slane %v345, %v2168
    %v2171 = vunpack.c.l.s4 1987475062
    %v2172 = vunpack.c.0.s8 %v2171
    %v2173 = vlaneseq
    %v2174 = vshrl.u32 %v2173, 7
    %v2175 = vsub.s32 %v2172, %v2174
    %v2176 = vrot.slane %v345, %v2175
    %v2178 = vunpack.c.l.s4 269488144
    %v2179 = vunpack.c.0.s8 %v2178
    %v2180 = vlaneseq
    %v2181 = vshrl.u32 %v2180, 7
    %v2182 = vsub.s32 %v2179, %v2181
    %v2183 = vrot.slane %v348, %v2182
    %v2185 = vunpack.c.l.s4 842150450
    %v2186 = vunpack.c.0.s8 %v2185
    %v2187 = vlaneseq
    %v2188 = vshrl.u32 %v2187, 7
    %v2189 = vsub.s32 %v2186, %v2188
    %v2190 = vrot.slane %v348, %v2189
    %v2192 = vunpack.c.l.s4 1414812756
    %v2193 = vunpack.c.0.s8 %v2192
    %v2194 = vlaneseq
    %v2195 = vshrl.u32 %v2194, 7
    %v2196 = vsub.s32 %v2193, %v2195
    %v2197 = vrot.slane %v348, %v2196
    %v2199 = vunpack.c.l.s4 1987475062
    %v2200 = vunpack.c.0.s8 %v2199
    %v2201 = vlaneseq
    %v2202 = vshrl.u32 %v2201, 7
    %v2203 = vsub.s32 %v2200, %v2202
    %v2204 = vrot.slane %v348, %v2203
    %v2205 = vcombine.low %v419, %v426
    %v2206 = vcombine.low %v433, %v440
    %v2208 = vunpack.c.l.s4 1983009808
    %v2209 = vunpack.c.0.s8 %v2208
    %v2210 = vlaneseq
    %v2211 = vshrl.u32 %v2210, 7
    %v2212 = vsub.s32 %v2209, %v2211
    %v2213 = vrot.slane %v2205, %v2212
    %v2215 = vunpack.c.l.s4 1983009808
    %v2216 = vunpack.c.0.s8 %v2215
    %v2217 = vlaneseq
    %v2218 = vshrl.u32 %v2217, 7
    %v2219 = vsub.s32 %v2216, %v2218
    %v2220 = vrot.slane %v2206, %v2219
    %v2221 = vcombine.low %v2213, %v2220
    %v2222 = vcombine.low %v447, %v454
    %v2223 = vcombine.low %v461, %v468
    %v2225 = vunpack.c.l.s4 1983009808
    %v2226 = vunpack.c.0.s8 %v2225
    %v2227 = vlaneseq
    %v2228 = vshrl.u32 %v2227, 7
    %v2229 = vsub.s32 %v2226, %v2228
    %v2230 = vrot.slane %v2222, %v2229
    %v2232 = vunpack.c.l.s4 1983009808
    %v2233 = vunpack.c.0.s8 %v2232
    %v2234 = vlaneseq
    %v2235 = vshrl.u32 %v2234, 7
    %v2236 = vsub.s32 %v2233, %v2235
    %v2237 = vrot.slane %v2223, %v2236
    %v2238 = vcombine.low %v2230, %v2237
    %v2239 = vcombine.low %v475, %v482
    %v2240 = vcombine.low %v489, %v496
    %v2242 = vunpack.c.l.s4 1983009808
    %v2243 = vunpack.c.0.s8 %v2242
    %v2244 = vlaneseq
    %v2245 = vshrl.u32 %v2244, 7
    %v2246 = vsub.s32 %v2243, %v2245
    %v2247 = vrot.slane %v2239, %v2246
    %v2249 = vunpack.c.l.s4 1983009808
    %v2250 = vunpack.c.0.s8 %v2249
    %v2251 = vlaneseq
    %v2252 = vshrl.u32 %v2251, 7
    %v2253 = vsub.s32 %v2250, %v2252
    %v2254 = vrot.slane %v2240, %v2253
    %v2255 = vcombine.low %v2247, %v2254
    %v2256 = vcombine.low %v503, %v510
    %v2257 = vcombine.low %v517, %v524
    %v2259 = vunpack.c.l.s4 1983009808
    %v2260 = vunpack.c.0.s8 %v2259
    %v2261 = vlaneseq
    %v2262 = vshrl.u32 %v2261, 7
    %v2263 = vsub.s32 %v2260, %v2262
    %v2264 = vrot.slane %v2256, %v2263
    %v2266 = vunpack.c.l.s4 1983009808
    %v2267 = vunpack.c.0.s8 %v2266
    %v2268 = vlaneseq
    %v2269 = vshrl.u32 %v2268, 7
    %v2270 = vsub.s32 %v2267, %v2269
    %v2271 = vrot.slane %v2257, %v2270
    %v2272 = vcombine.low %v2264, %v2271
    %v2273 = vcombine.low %v531, %v538
    %v2274 = vcombine.low %v545, %v552
    %v2276 = vunpack.c.l.s4 1983009808
    %v2277 = vunpack.c.0.s8 %v2276
    %v2278 = vlaneseq
    %v2279 = vshrl.u32 %v2278, 7
    %v2280 = vsub.s32 %v2277, %v2279
    %v2281 = vrot.slane %v2273, %v2280
    %v2283 = vunpack.c.l.s4 1983009808
    %v2284 = vunpack.c.0.s8 %v2283
    %v2285 = vlaneseq
    %v2286 = vshrl.u32 %v2285, 7
    %v2287 = vsub.s32 %v2284, %v2286
    %v2288 = vrot.slane %v2274, %v2287
    %v2289 = vcombine.low %v2281, %v2288
    %v2290 = vcombine.low %v559, %v566
    %v2291 = vcombine.low %v573, %v580
    %v2293 = vunpack.c.l.s4 1983009808
    %v2294 = vunpack.c.0.s8 %v2293
    %v2295 = vlaneseq
    %v2296 = vshrl.u32 %v2295, 7
    %v2297 = vsub.s32 %v2294, %v2296
    %v2298 = vrot.slane %v2290, %v2297
    %v2300 = vunpack.c.l.s4 1983009808
    %v2301 = vunpack.c.0.s8 %v2300
    %v2302 = vlaneseq
    %v2303 = vshrl.u32 %v2302, 7
    %v2304 = vsub.s32 %v2301, %v2303
    %v2305 = vrot.slane %v2291, %v2304
    %v2306 = vcombine.low %v2298, %v2305
    %v2307 = vcombine.low %v587, %v594
    %v2308 = vcombine.low %v601, %v608
    %v2310 = vunpack.c.l.s4 1983009808
    %v2311 = vunpack.c.0.s8 %v2310
    %v2312 = vlaneseq
    %v2313 = vshrl.u32 %v2312, 7
    %v2314 = vsub.s32 %v2311, %v2313
    %v2315 = vrot.slane %v2307, %v2314
    %v2317 = vunpack.c.l.s4 1983009808
    %v2318 = vunpack.c.0.s8 %v2317
    %v2319 = vlaneseq
    %v2320 = vshrl.u32 %v2319, 7
    %v2321 = vsub.s32 %v2318, %v2320
    %v2322 = vrot.slane %v2308, %v2321
    %v2323 = vcombine.low %v2315, %v2322
    %v2324 = vcombine.low %v615, %v622
    %v2325 = vcombine.low %v629, %v636
    %v2327 = vunpack.c.l.s4 1983009808
    %v2328 = vunpack.c.0.s8 %v2327
    %v2329 = vlaneseq
    %v2330 = vshrl.u32 %v2329, 7
    %v2331 = vsub.s32 %v2328, %v2330
    %v2332 = vrot.slane %v2324, %v2331
    %v2334 = vunpack.c.l.s4 1983009808
    %v2335 = vunpack.c.0.s8 %v2334
    %v2336 = vlaneseq
    %v2337 = vshrl.u32 %v2336, 7
    %v2338 = vsub.s32 %v2335, %v2337
    %v2339 = vrot.slane %v2325, %v2338
    %v2340 = vcombine.low %v2332, %v2339
    %v2341 = vcombine.low %v643, %v650
    %v2342 = vcombine.low %v657, %v664
    %v2344 = vunpack.c.l.s4 1983009808
    %v2345 = vunpack.c.0.s8 %v2344
    %v2346 = vlaneseq
    %v2347 = vshrl.u32 %v2346, 7
    %v2348 = vsub.s32 %v2345, %v2347
    %v2349 = vrot.slane %v2341, %v2348
    %v2351 = vunpack.c.l.s4 1983009808
    %v2352 = vunpack.c.0.s8 %v2351
    %v2353 = vlaneseq
    %v2354 = vshrl.u32 %v2353, 7
    %v2355 = vsub.s32 %v2352, %v2354
    %v2356 = vrot.slane %v2342, %v2355
    %v2357 = vcombine.low %v2349, %v2356
    %v2358 = vcombine.low %v671, %v678
    %v2359 = vcombine.low %v685, %v692
    %v2361 = vunpack.c.l.s4 1983009808
    %v2362 = vunpack.c.0.s8 %v2361
    %v2363 = vlaneseq
    %v2364 = vshrl.u32 %v2363, 7
    %v2365 = vsub.s32 %v2362, %v2364
    %v2366 = vrot.slane %v2358, %v2365
    %v2368 = vunpack.c.l.s4 1983009808
    %v2369 = vunpack.c.0.s8 %v2368
    %v2370 = vlaneseq
    %v2371 = vshrl.u32 %v2370, 7
    %v2372 = vsub.s32 %v2369, %v2371
    %v2373 = vrot.slane %v2359, %v2372
    %v2374 = vcombine.low %v2366, %v2373
    %v2375 = vcombine.low %v699, %v706
    %v2376 = vcombine.low %v713, %v720
    %v2378 = vunpack.c.l.s4 1983009808
    %v2379 = vunpack.c.0.s8 %v2378
    %v2380 = vlaneseq
    %v2381 = vshrl.u32 %v2380, 7
    %v2382 = vsub.s32 %v2379, %v2381
    %v2383 = vrot.slane %v2375, %v2382
    %v2385 = vunpack.c.l.s4 1983009808
    %v2386 = vunpack.c.0.s8 %v2385
    %v2387 = vlaneseq
    %v2388 = vshrl.u32 %v2387, 7
    %v2389 = vsub.s32 %v2386, %v2388
    %v2390 = vrot.slane %v2376, %v2389
    %v2391 = vcombine.low %v2383, %v2390
    %v2392 = vcombine.low %v727, %v734
    %v2393 = vcombine.low %v741, %v748
    %v2395 = vunpack.c.l.s4 1983009808
    %v2396 = vunpack.c.0.s8 %v2395
    %v2397 = vlaneseq
    %v2398 = vshrl.u32 %v2397, 7
    %v2399 = vsub.s32 %v2396, %v2398
    %v2400 = vrot.slane %v2392, %v2399
    %v2402 = vunpack.c.l.s4 1983009808
    %v2403 = vunpack.c.0.s8 %v2402
    %v2404 = vlaneseq
    %v2405 = vshrl.u32 %v2404, 7
    %v2406 = vsub.s32 %v2403, %v2405
    %v2407 = vrot.slane %v2393, %v2406
    %v2408 = vcombine.low %v2400, %v2407
    %v2409 = vcombine.low %v755, %v762
    %v2410 = vcombine.low %v769, %v776
    %v2412 = vunpack.c.l.s4 1983009808
    %v2413 = vunpack.c.0.s8 %v2412
    %v2414 = vlaneseq
    %v2415 = vshrl.u32 %v2414, 7
    %v2416 = vsub.s32 %v2413, %v2415
    %v2417 = vrot.slane %v2409, %v2416
    %v2419 = vunpack.c.l.s4 1983009808
    %v2420 = vunpack.c.0.s8 %v2419
    %v2421 = vlaneseq
    %v2422 = vshrl.u32 %v2421, 7
    %v2423 = vsub.s32 %v2420, %v2422
    %v2424 = vrot.slane %v2410, %v2423
    %v2425 = vcombine.low %v2417, %v2424
    %v2426 = vcombine.low %v783, %v790
    %v2427 = vcombine.low %v797, %v804
    %v2429 = vunpack.c.l.s4 1983009808
    %v2430 = vunpack.c.0.s8 %v2429
    %v2431 = vlaneseq
    %v2432 = vshrl.u32 %v2431, 7
    %v2433 = vsub.s32 %v2430, %v2432
    %v2434 = vrot.slane %v2426, %v2433
    %v2436 = vunpack.c.l.s4 1983009808
    %v2437 = vunpack.c.0.s8 %v2436
    %v2438 = vlaneseq
    %v2439 = vshrl.u32 %v2438, 7
    %v2440 = vsub.s32 %v2437, %v2439
    %v2441 = vrot.slane %v2427, %v2440
    %v2442 = vcombine.low %v2434, %v2441
    %v2443 = vcombine.low %v811, %v818
    %v2444 = vcombine.low %v825, %v832
    %v2446 = vunpack.c.l.s4 1983009808
    %v2447 = vunpack.c.0.s8 %v2446
    %v2448 = vlaneseq
    %v2449 = vshrl.u32 %v2448, 7
    %v2450 = vsub.s32 %v2447, %v2449
    %v2451 = vrot.slane %v2443, %v2450
    %v2453 = vunpack.c.l.s4 1983009808
    %v2454 = vunpack.c.0.s8 %v2453
    %v2455 = vlaneseq
    %v2456 = vshrl.u32 %v2455, 7
    %v2457 = vsub.s32 %v2454, %v2456
    %v2458 = vrot.slane %v2444, %v2457
    %v2459 = vcombine.low %v2451, %v2458
    %v2460 = vcombine.low %v839, %v846
    %v2461 = vcombine.low %v853, %v860
    %v2463 = vunpack.c.l.s4 1983009808
    %v2464 = vunpack.c.0.s8 %v2463
    %v2465 = vlaneseq
    %v2466 = vshrl.u32 %v2465, 7
    %v2467 = vsub.s32 %v2464, %v2466
    %v2468 = vrot.slane %v2460, %v2467
    %v2470 = vunpack.c.l.s4 1983009808
    %v2471 = vunpack.c.0.s8 %v2470
    %v2472 = vlaneseq
    %v2473 = vshrl.u32 %v2472, 7
    %v2474 = vsub.s32 %v2471, %v2473
    %v2475 = vrot.slane %v2461, %v2474
    %v2476 = vcombine.low %v2468, %v2475
    %v2477 = vcombine.low %v867, %v874
    %v2478 = vcombine.low %v881, %v888
    %v2480 = vunpack.c.l.s4 1983009808
    %v2481 = vunpack.c.0.s8 %v2480
    %v2482 = vlaneseq
    %v2483 = vshrl.u32 %v2482, 7
    %v2484 = vsub.s32 %v2481, %v2483
    %v2485 = vrot.slane %v2477, %v2484
    %v2487 = vunpack.c.l.s4 1983009808
    %v2488 = vunpack.c.0.s8 %v2487
    %v2489 = vlaneseq
    %v2490 = vshrl.u32 %v2489, 7
    %v2491 = vsub.s32 %v2488, %v2490
    %v2492 = vrot.slane %v2478, %v2491
    %v2493 = vcombine.low %v2485, %v2492
    %v2494 = vcombine.low %v895, %v902
    %v2495 = vcombine.low %v909, %v916
    %v2497 = vunpack.c.l.s4 1983009808
    %v2498 = vunpack.c.0.s8 %v2497
    %v2499 = vlaneseq
    %v2500 = vshrl.u32 %v2499, 7
    %v2501 = vsub.s32 %v2498, %v2500
    %v2502 = vrot.slane %v2494, %v2501
    %v2504 = vunpack.c.l.s4 1983009808
    %v2505 = vunpack.c.0.s8 %v2504
    %v2506 = vlaneseq
    %v2507 = vshrl.u32 %v2506, 7
    %v2508 = vsub.s32 %v2505, %v2507
    %v2509 = vrot.slane %v2495, %v2508
    %v2510 = vcombine.low %v2502, %v2509
    %v2511 = vcombine.low %v923, %v930
    %v2512 = vcombine.low %v937, %v944
    %v2514 = vunpack.c.l.s4 1983009808
    %v2515 = vunpack.c.0.s8 %v2514
    %v2516 = vlaneseq
    %v2517 = vshrl.u32 %v2516, 7
    %v2518 = vsub.s32 %v2515, %v2517
    %v2519 = vrot.slane %v2511, %v2518
    %v2521 = vunpack.c.l.s4 1983009808
    %v2522 = vunpack.c.0.s8 %v2521
    %v2523 = vlaneseq
    %v2524 = vshrl.u32 %v2523, 7
    %v2525 = vsub.s32 %v2522, %v2524
    %v2526 = vrot.slane %v2512, %v2525
    %v2527 = vcombine.low %v2519, %v2526
    %v2528 = vcombine.low %v951, %v958
    %v2529 = vcombine.low %v965, %v972
    %v2531 = vunpack.c.l.s4 1983009808
    %v2532 = vunpack.c.0.s8 %v2531
    %v2533 = vlaneseq
    %v2534 = vshrl.u32 %v2533, 7
    %v2535 = vsub.s32 %v2532, %v2534
    %v2536 = vrot.slane %v2528, %v2535
    %v2538 = vunpack.c.l.s4 1983009808
    %v2539 = vunpack.c.0.s8 %v2538
    %v2540 = vlaneseq
    %v2541 = vshrl.u32 %v2540, 7
    %v2542 = vsub.s32 %v2539, %v2541
    %v2543 = vrot.slane %v2529, %v2542
    %v2544 = vcombine.low %v2536, %v2543
    %v2545 = vcombine.low %v979, %v986
    %v2546 = vcombine.low %v993, %v1000
    %v2548 = vunpack.c.l.s4 1983009808
    %v2549 = vunpack.c.0.s8 %v2548
    %v2550 = vlaneseq
    %v2551 = vshrl.u32 %v2550, 7
    %v2552 = vsub.s32 %v2549, %v2551
    %v2553 = vrot.slane %v2545, %v2552
    %v2555 = vunpack.c.l.s4 1983009808
    %v2556 = vunpack.c.0.s8 %v2555
    %v2557 = vlaneseq
    %v2558 = vshrl.u32 %v2557, 7
    %v2559 = vsub.s32 %v2556, %v2558
    %v2560 = vrot.slane %v2546, %v2559
    %v2561 = vcombine.low %v2553, %v2560
    %v2562 = vcombine.low %v1007, %v1014
    %v2563 = vcombine.low %v1021, %v1028
    %v2565 = vunpack.c.l.s4 1983009808
    %v2566 = vunpack.c.0.s8 %v2565
    %v2567 = vlaneseq
    %v2568 = vshrl.u32 %v2567, 7
    %v2569 = vsub.s32 %v2566, %v2568
    %v2570 = vrot.slane %v2562, %v2569
    %v2572 = vunpack.c.l.s4 1983009808
    %v2573 = vunpack.c.0.s8 %v2572
    %v2574 = vlaneseq
    %v2575 = vshrl.u32 %v2574, 7
    %v2576 = vsub.s32 %v2573, %v2575
    %v2577 = vrot.slane %v2563, %v2576
    %v2578 = vcombine.low %v2570, %v2577
    %v2579 = vcombine.low %v1035, %v1042
    %v2580 = vcombine.low %v1049, %v1056
    %v2582 = vunpack.c.l.s4 1983009808
    %v2583 = vunpack.c.0.s8 %v2582
    %v2584 = vlaneseq
    %v2585 = vshrl.u32 %v2584, 7
    %v2586 = vsub.s32 %v2583, %v2585
    %v2587 = vrot.slane %v2579, %v2586
    %v2589 = vunpack.c.l.s4 1983009808
    %v2590 = vunpack.c.0.s8 %v2589
    %v2591 = vlaneseq
    %v2592 = vshrl.u32 %v2591, 7
    %v2593 = vsub.s32 %v2590, %v2592
    %v2594 = vrot.slane %v2580, %v2593
    %v2595 = vcombine.low %v2587, %v2594
    %v2596 = vcombine.low %v1063, %v1070
    %v2597 = vcombine.low %v1077, %v1084
    %v2599 = vunpack.c.l.s4 1983009808
    %v2600 = vunpack.c.0.s8 %v2599
    %v2601 = vlaneseq
    %v2602 = vshrl.u32 %v2601, 7
    %v2603 = vsub.s32 %v2600, %v2602
    %v2604 = vrot.slane %v2596, %v2603
    %v2606 = vunpack.c.l.s4 1983009808
    %v2607 = vunpack.c.0.s8 %v2606
    %v2608 = vlaneseq
    %v2609 = vshrl.u32 %v2608, 7
    %v2610 = vsub.s32 %v2607, %v2609
    %v2611 = vrot.slane %v2597, %v2610
    %v2612 = vcombine.low %v2604, %v2611
    %v2613 = vcombine.low %v1091, %v1098
    %v2614 = vcombine.low %v1105, %v1112
    %v2616 = vunpack.c.l.s4 1983009808
    %v2617 = vunpack.c.0.s8 %v2616
    %v2618 = vlaneseq
    %v2619 = vshrl.u32 %v2618, 7
    %v2620 = vsub.s32 %v2617, %v2619
    %v2621 = vrot.slane %v2613, %v2620
    %v2623 = vunpack.c.l.s4 1983009808
    %v2624 = vunpack.c.0.s8 %v2623
    %v2625 = vlaneseq
    %v2626 = vshrl.u32 %v2625, 7
    %v2627 = vsub.s32 %v2624, %v2626
    %v2628 = vrot.slane %v2614, %v2627
    %v2629 = vcombine.low %v2621, %v2628
    %v2630 = vcombine.low %v1119, %v1126
    %v2631 = vcombine.low %v1133, %v1140
    %v2633 = vunpack.c.l.s4 1983009808
    %v2634 = vunpack.c.0.s8 %v2633
    %v2635 = vlaneseq
    %v2636 = vshrl.u32 %v2635, 7
    %v2637 = vsub.s32 %v2634, %v2636
    %v2638 = vrot.slane %v2630, %v2637
    %v2640 = vunpack.c.l.s4 1983009808
    %v2641 = vunpack.c.0.s8 %v2640
    %v2642 = vlaneseq
    %v2643 = vshrl.u32 %v2642, 7
    %v2644 = vsub.s32 %v2641, %v2643
    %v2645 = vrot.slane %v2631, %v2644
    %v2646 = vcombine.low %v2638, %v2645
    %v2647 = vcombine.low %v1147, %v1154
    %v2648 = vcombine.low %v1161, %v1168
    %v2650 = vunpack.c.l.s4 1983009808
    %v2651 = vunpack.c.0.s8 %v2650
    %v2652 = vlaneseq
    %v2653 = vshrl.u32 %v2652, 7
    %v2654 = vsub.s32 %v2651, %v2653
    %v2655 = vrot.slane %v2647, %v2654
    %v2657 = vunpack.c.l.s4 1983009808
    %v2658 = vunpack.c.0.s8 %v2657
    %v2659 = vlaneseq
    %v2660 = vshrl.u32 %v2659, 7
    %v2661 = vsub.s32 %v2658, %v2660
    %v2662 = vrot.slane %v2648, %v2661
    %v2663 = vcombine.low %v2655, %v2662
    %v2664 = vcombine.low %v1175, %v1182
    %v2665 = vcombine.low %v1189, %v1196
    %v2667 = vunpack.c.l.s4 1983009808
    %v2668 = vunpack.c.0.s8 %v2667
    %v2669 = vlaneseq
    %v2670 = vshrl.u32 %v2669, 7
    %v2671 = vsub.s32 %v2668, %v2670
    %v2672 = vrot.slane %v2664, %v2671
    %v2674 = vunpack.c.l.s4 1983009808
    %v2675 = vunpack.c.0.s8 %v2674
    %v2676 = vlaneseq
    %v2677 = vshrl.u32 %v2676, 7
    %v2678 = vsub.s32 %v2675, %v2677
    %v2679 = vrot.slane %v2665, %v2678
    %v2680 = vcombine.low %v2672, %v2679
    %v2681 = vcombine.low %v1203, %v1210
    %v2682 = vcombine.low %v1217, %v1224
    %v2684 = vunpack.c.l.s4 1983009808
    %v2685 = vunpack.c.0.s8 %v2684
    %v2686 = vlaneseq
    %v2687 = vshrl.u32 %v2686, 7
    %v2688 = vsub.s32 %v2685, %v2687
    %v2689 = vrot.slane %v2681, %v2688
    %v2691 = vunpack.c.l.s4 1983009808
    %v2692 = vunpack.c.0.s8 %v2691
    %v2693 = vlaneseq
    %v2694 = vshrl.u32 %v2693, 7
    %v2695 = vsub.s32 %v2692, %v2694
    %v2696 = vrot.slane %v2682, %v2695
    %v2697 = vcombine.low %v2689, %v2696
    %v2698 = vcombine.low %v1231, %v1238
    %v2699 = vcombine.low %v1245, %v1252
    %v2701 = vunpack.c.l.s4 1983009808
    %v2702 = vunpack.c.0.s8 %v2701
    %v2703 = vlaneseq
    %v2704 = vshrl.u32 %v2703, 7
    %v2705 = vsub.s32 %v2702, %v2704
    %v2706 = vrot.slane %v2698, %v2705
    %v2708 = vunpack.c.l.s4 1983009808
    %v2709 = vunpack.c.0.s8 %v2708
    %v2710 = vlaneseq
    %v2711 = vshrl.u32 %v2710, 7
    %v2712 = vsub.s32 %v2709, %v2711
    %v2713 = vrot.slane %v2699, %v2712
    %v2714 = vcombine.low %v2706, %v2713
    %v2715 = vcombine.low %v1259, %v1266
    %v2716 = vcombine.low %v1273, %v1280
    %v2718 = vunpack.c.l.s4 1983009808
    %v2719 = vunpack.c.0.s8 %v2718
    %v2720 = vlaneseq
    %v2721 = vshrl.u32 %v2720, 7
    %v2722 = vsub.s32 %v2719, %v2721
    %v2723 = vrot.slane %v2715, %v2722
    %v2725 = vunpack.c.l.s4 1983009808
    %v2726 = vunpack.c.0.s8 %v2725
    %v2727 = vlaneseq
    %v2728 = vshrl.u32 %v2727, 7
    %v2729 = vsub.s32 %v2726, %v2728
    %v2730 = vrot.slane %v2716, %v2729
    %v2731 = vcombine.low %v2723, %v2730
    %v2732 = vcombine.low %v1287, %v1294
    %v2733 = vcombine.low %v1301, %v1308
    %v2735 = vunpack.c.l.s4 1983009808
    %v2736 = vunpack.c.0.s8 %v2735
    %v2737 = vlaneseq
    %v2738 = vshrl.u32 %v2737, 7
    %v2739 = vsub.s32 %v2736, %v2738
    %v2740 = vrot.slane %v2732, %v2739
    %v2742 = vunpack.c.l.s4 1983009808
    %v2743 = vunpack.c.0.s8 %v2742
    %v2744 = vlaneseq
    %v2745 = vshrl.u32 %v2744, 7
    %v2746 = vsub.s32 %v2743, %v2745
    %v2747 = vrot.slane %v2733, %v2746
    %v2748 = vcombine.low %v2740, %v2747
    %v2749 = vcombine.low %v1315, %v1322
    %v2750 = vcombine.low %v1329, %v1336
    %v2752 = vunpack.c.l.s4 1983009808
    %v2753 = vunpack.c.0.s8 %v2752
    %v2754 = vlaneseq
    %v2755 = vshrl.u32 %v2754, 7
    %v2756 = vsub.s32 %v2753, %v2755
    %v2757 = vrot.slane %v2749, %v2756
    %v2759 = vunpack.c.l.s4 1983009808
    %v2760 = vunpack.c.0.s8 %v2759
    %v2761 = vlaneseq
    %v2762 = vshrl.u32 %v2761, 7
    %v2763 = vsub.s32 %v2760, %v2762
    %v2764 = vrot.slane %v2750, %v2763
    %v2765 = vcombine.low %v2757, %v2764
    %v2766 = vcombine.low %v1343, %v1350
    %v2767 = vcombine.low %v1357, %v1364
    %v2769 = vunpack.c.l.s4 1983009808
    %v2770 = vunpack.c.0.s8 %v2769
    %v2771 = vlaneseq
    %v2772 = vshrl.u32 %v2771, 7
    %v2773 = vsub.s32 %v2770, %v2772
    %v2774 = vrot.slane %v2766, %v2773
    %v2776 = vunpack.c.l.s4 1983009808
    %v2777 = vunpack.c.0.s8 %v2776
    %v2778 = vlaneseq
    %v2779 = vshrl.u32 %v2778, 7
    %v2780 = vsub.s32 %v2777, %v2779
    %v2781 = vrot.slane %v2767, %v2780
    %v2782 = vcombine.low %v2774, %v2781
    %v2783 = vcombine.low %v1371, %v1378
    %v2784 = vcombine.low %v1385, %v1392
    %v2786 = vunpack.c.l.s4 1983009808
    %v2787 = vunpack.c.0.s8 %v2786
    %v2788 = vlaneseq
    %v2789 = vshrl.u32 %v2788, 7
    %v2790 = vsub.s32 %v2787, %v2789
    %v2791 = vrot.slane %v2783, %v2790
    %v2793 = vunpack.c.l.s4 1983009808
    %v2794 = vunpack.c.0.s8 %v2793
    %v2795 = vlaneseq
    %v2796 = vshrl.u32 %v2795, 7
    %v2797 = vsub.s32 %v2794, %v2796
    %v2798 = vrot.slane %v2784, %v2797
    %v2799 = vcombine.low %v2791, %v2798
    %v2800 = vcombine.low %v1399, %v1406
    %v2801 = vcombine.low %v1413, %v1420
    %v2803 = vunpack.c.l.s4 1983009808
    %v2804 = vunpack.c.0.s8 %v2803
    %v2805 = vlaneseq
    %v2806 = vshrl.u32 %v2805, 7
    %v2807 = vsub.s32 %v2804, %v2806
    %v2808 = vrot.slane %v2800, %v2807
    %v2810 = vunpack.c.l.s4 1983009808
    %v2811 = vunpack.c.0.s8 %v2810
    %v2812 = vlaneseq
    %v2813 = vshrl.u32 %v2812, 7
    %v2814 = vsub.s32 %v2811, %v2813
    %v2815 = vrot.slane %v2801, %v2814
    %v2816 = vcombine.low %v2808, %v2815
    %v2817 = vcombine.low %v1427, %v1434
    %v2818 = vcombine.low %v1441, %v1448
    %v2820 = vunpack.c.l.s4 1983009808
    %v2821 = vunpack.c.0.s8 %v2820
    %v2822 = vlaneseq
    %v2823 = vshrl.u32 %v2822, 7
    %v2824 = vsub.s32 %v2821, %v2823
    %v2825 = vrot.slane %v2817, %v2824
    %v2827 = vunpack.c.l.s4 1983009808
    %v2828 = vunpack.c.0.s8 %v2827
    %v2829 = vlaneseq
    %v2830 = vshrl.u32 %v2829, 7
    %v2831 = vsub.s32 %v2828, %v2830
    %v2832 = vrot.slane %v2818, %v2831
    %v2833 = vcombine.low %v2825, %v2832
    %v2834 = vcombine.low %v1455, %v1462
    %v2835 = vcombine.low %v1469, %v1476
    %v2837 = vunpack.c.l.s4 1983009808
    %v2838 = vunpack.c.0.s8 %v2837
    %v2839 = vlaneseq
    %v2840 = vshrl.u32 %v2839, 7
    %v2841 = vsub.s32 %v2838, %v2840
    %v2842 = vrot.slane %v2834, %v2841
    %v2844 = vunpack.c.l.s4 1983009808
    %v2845 = vunpack.c.0.s8 %v2844
    %v2846 = vlaneseq
    %v2847 = vshrl.u32 %v2846, 7
    %v2848 = vsub.s32 %v2845, %v2847
    %v2849 = vrot.slane %v2835, %v2848
    %v2850 = vcombine.low %v2842, %v2849
    %v2851 = vcombine.low %v1483, %v1490
    %v2852 = vcombine.low %v1497, %v1504
    %v2854 = vunpack.c.l.s4 1983009808
    %v2855 = vunpack.c.0.s8 %v2854
    %v2856 = vlaneseq
    %v2857 = vshrl.u32 %v2856, 7
    %v2858 = vsub.s32 %v2855, %v2857
    %v2859 = vrot.slane %v2851, %v2858
    %v2861 = vunpack.c.l.s4 1983009808
    %v2862 = vunpack.c.0.s8 %v2861
    %v2863 = vlaneseq
    %v2864 = vshrl.u32 %v2863, 7
    %v2865 = vsub.s32 %v2862, %v2864
    %v2866 = vrot.slane %v2852, %v2865
    %v2867 = vcombine.low %v2859, %v2866
    %v2868 = vcombine.low %v1511, %v1518
    %v2869 = vcombine.low %v1525, %v1532
    %v2871 = vunpack.c.l.s4 1983009808
    %v2872 = vunpack.c.0.s8 %v2871
    %v2873 = vlaneseq
    %v2874 = vshrl.u32 %v2873, 7
    %v2875 = vsub.s32 %v2872, %v2874
    %v2876 = vrot.slane %v2868, %v2875
    %v2878 = vunpack.c.l.s4 1983009808
    %v2879 = vunpack.c.0.s8 %v2878
    %v2880 = vlaneseq
    %v2881 = vshrl.u32 %v2880, 7
    %v2882 = vsub.s32 %v2879, %v2881
    %v2883 = vrot.slane %v2869, %v2882
    %v2884 = vcombine.low %v2876, %v2883
    %v2885 = vcombine.low %v1539, %v1546
    %v2886 = vcombine.low %v1553, %v1560
    %v2888 = vunpack.c.l.s4 1983009808
    %v2889 = vunpack.c.0.s8 %v2888
    %v2890 = vlaneseq
    %v2891 = vshrl.u32 %v2890, 7
    %v2892 = vsub.s32 %v2889, %v2891
    %v2893 = vrot.slane %v2885, %v2892
    %v2895 = vunpack.c.l.s4 1983009808
    %v2896 = vunpack.c.0.s8 %v2895
    %v2897 = vlaneseq
    %v2898 = vshrl.u32 %v2897, 7
    %v2899 = vsub.s32 %v2896, %v2898
    %v2900 = vrot.slane %v2886, %v2899
    %v2901 = vcombine.low %v2893, %v2900
    %v2902 = vcombine.low %v1567, %v1574
    %v2903 = vcombine.low %v1581, %v1588
    %v2905 = vunpack.c.l.s4 1983009808
    %v2906 = vunpack.c.0.s8 %v2905
    %v2907 = vlaneseq
    %v2908 = vshrl.u32 %v2907, 7
    %v2909 = vsub.s32 %v2906, %v2908
    %v2910 = vrot.slane %v2902, %v2909
    %v2912 = vunpack.c.l.s4 1983009808
    %v2913 = vunpack.c.0.s8 %v2912
    %v2914 = vlaneseq
    %v2915 = vshrl.u32 %v2914, 7
    %v2916 = vsub.s32 %v2913, %v2915
    %v2917 = vrot.slane %v2903, %v2916
    %v2918 = vcombine.low %v2910, %v2917
    %v2919 = vcombine.low %v1595, %v1602
    %v2920 = vcombine.low %v1609, %v1616
    %v2922 = vunpack.c.l.s4 1983009808
    %v2923 = vunpack.c.0.s8 %v2922
    %v2924 = vlaneseq
    %v2925 = vshrl.u32 %v2924, 7
    %v2926 = vsub.s32 %v2923, %v2925
    %v2927 = vrot.slane %v2919, %v2926
    %v2929 = vunpack.c.l.s4 1983009808
    %v2930 = vunpack.c.0.s8 %v2929
    %v2931 = vlaneseq
    %v2932 = vshrl.u32 %v2931, 7
    %v2933 = vsub.s32 %v2930, %v2932
    %v2934 = vrot.slane %v2920, %v2933
    %v2935 = vcombine.low %v2927, %v2934
    %v2936 = vcombine.low %v1623, %v1630
    %v2937 = vcombine.low %v1637, %v1644
    %v2939 = vunpack.c.l.s4 1983009808
    %v2940 = vunpack.c.0.s8 %v2939
    %v2941 = vlaneseq
    %v2942 = vshrl.u32 %v2941, 7
    %v2943 = vsub.s32 %v2940, %v2942
    %v2944 = vrot.slane %v2936, %v2943
    %v2946 = vunpack.c.l.s4 1983009808
    %v2947 = vunpack.c.0.s8 %v2946
    %v2948 = vlaneseq
    %v2949 = vshrl.u32 %v2948, 7
    %v2950 = vsub.s32 %v2947, %v2949
    %v2951 = vrot.slane %v2937, %v2950
    %v2952 = vcombine.low %v2944, %v2951
    %v2953 = vcombine.low %v1651, %v1658
    %v2954 = vcombine.low %v1665, %v1672
    %v2956 = vunpack.c.l.s4 1983009808
    %v2957 = vunpack.c.0.s8 %v2956
    %v2958 = vlaneseq
    %v2959 = vshrl.u32 %v2958, 7
    %v2960 = vsub.s32 %v2957, %v2959
    %v2961 = vrot.slane %v2953, %v2960
    %v2963 = vunpack.c.l.s4 1983009808
    %v2964 = vunpack.c.0.s8 %v2963
    %v2965 = vlaneseq
    %v2966 = vshrl.u32 %v2965, 7
    %v2967 = vsub.s32 %v2964, %v2966
    %v2968 = vrot.slane %v2954, %v2967
    %v2969 = vcombine.low %v2961, %v2968
    %v2970 = vcombine.low %v1679, %v1686
    %v2971 = vcombine.low %v1693, %v1700
    %v2973 = vunpack.c.l.s4 1983009808
    %v2974 = vunpack.c.0.s8 %v2973
    %v2975 = vlaneseq
    %v2976 = vshrl.u32 %v2975, 7
    %v2977 = vsub.s32 %v2974, %v2976
    %v2978 = vrot.slane %v2970, %v2977
    %v2980 = vunpack.c.l.s4 1983009808
    %v2981 = vunpack.c.0.s8 %v2980
    %v2982 = vlaneseq
    %v2983 = vshrl.u32 %v2982, 7
    %v2984 = vsub.s32 %v2981, %v2983
    %v2985 = vrot.slane %v2971, %v2984
    %v2986 = vcombine.low %v2978, %v2985
    %v2987 = vcombine.low %v1707, %v1714
    %v2988 = vcombine.low %v1721, %v1728
    %v2990 = vunpack.c.l.s4 1983009808
    %v2991 = vunpack.c.0.s8 %v2990
    %v2992 = vlaneseq
    %v2993 = vshrl.u32 %v2992, 7
    %v2994 = vsub.s32 %v2991, %v2993
    %v2995 = vrot.slane %v2987, %v2994
    %v2997 = vunpack.c.l.s4 1983009808
    %v2998 = vunpack.c.0.s8 %v2997
    %v2999 = vlaneseq
    %v3000 = vshrl.u32 %v2999, 7
    %v3001 = vsub.s32 %v2998, %v3000
    %v3002 = vrot.slane %v2988, %v3001
    %v3003 = vcombine.low %v2995, %v3002
    %v3004 = vcombine.low %v1735, %v1742
    %v3005 = vcombine.low %v1749, %v1756
    %v3007 = vunpack.c.l.s4 1983009808
    %v3008 = vunpack.c.0.s8 %v3007
    %v3009 = vlaneseq
    %v3010 = vshrl.u32 %v3009, 7
    %v3011 = vsub.s32 %v3008, %v3010
    %v3012 = vrot.slane %v3004, %v3011
    %v3014 = vunpack.c.l.s4 1983009808
    %v3015 = vunpack.c.0.s8 %v3014
    %v3016 = vlaneseq
    %v3017 = vshrl.u32 %v3016, 7
    %v3018 = vsub.s32 %v3015, %v3017
    %v3019 = vrot.slane %v3005, %v3018
    %v3020 = vcombine.low %v3012, %v3019
    %v3021 = vcombine.low %v1763, %v1770
    %v3022 = vcombine.low %v1777, %v1784
    %v3024 = vunpack.c.l.s4 1983009808
    %v3025 = vunpack.c.0.s8 %v3024
    %v3026 = vlaneseq
    %v3027 = vshrl.u32 %v3026, 7
    %v3028 = vsub.s32 %v3025, %v3027
    %v3029 = vrot.slane %v3021, %v3028
    %v3031 = vunpack.c.l.s4 1983009808
    %v3032 = vunpack.c.0.s8 %v3031
    %v3033 = vlaneseq
    %v3034 = vshrl.u32 %v3033, 7
    %v3035 = vsub.s32 %v3032, %v3034
    %v3036 = vrot.slane %v3022, %v3035
    %v3037 = vcombine.low %v3029, %v3036
    %v3038 = vcombine.low %v1791, %v1798
    %v3039 = vcombine.low %v1805, %v1812
    %v3041 = vunpack.c.l.s4 1983009808
    %v3042 = vunpack.c.0.s8 %v3041
    %v3043 = vlaneseq
    %v3044 = vshrl.u32 %v3043, 7
    %v3045 = vsub.s32 %v3042, %v3044
    %v3046 = vrot.slane %v3038, %v3045
    %v3048 = vunpack.c.l.s4 1983009808
    %v3049 = vunpack.c.0.s8 %v3048
    %v3050 = vlaneseq
    %v3051 = vshrl.u32 %v3050, 7
    %v3052 = vsub.s32 %v3049, %v3051
    %v3053 = vrot.slane %v3039, %v3052
    %v3054 = vcombine.low %v3046, %v3053
    %v3055 = vcombine.low %v1819, %v1826
    %v3056 = vcombine.low %v1833, %v1840
    %v3058 = vunpack.c.l.s4 1983009808
    %v3059 = vunpack.c.0.s8 %v3058
    %v3060 = vlaneseq
    %v3061 = vshrl.u32 %v3060, 7
    %v3062 = vsub.s32 %v3059, %v3061
    %v3063 = vrot.slane %v3055, %v3062
    %v3065 = vunpack.c.l.s4 1983009808
    %v3066 = vunpack.c.0.s8 %v3065
    %v3067 = vlaneseq
    %v3068 = vshrl.u32 %v3067, 7
    %v3069 = vsub.s32 %v3066, %v3068
    %v3070 = vrot.slane %v3056, %v3069
    %v3071 = vcombine.low %v3063, %v3070
    %v3072 = vcombine.low %v1847, %v1854
    %v3073 = vcombine.low %v1861, %v1868
    %v3075 = vunpack.c.l.s4 1983009808
    %v3076 = vunpack.c.0.s8 %v3075
    %v3077 = vlaneseq
    %v3078 = vshrl.u32 %v3077, 7
    %v3079 = vsub.s32 %v3076, %v3078
    %v3080 = vrot.slane %v3072, %v3079
    %v3082 = vunpack.c.l.s4 1983009808
    %v3083 = vunpack.c.0.s8 %v3082
    %v3084 = vlaneseq
    %v3085 = vshrl.u32 %v3084, 7
    %v3086 = vsub.s32 %v3083, %v3085
    %v3087 = vrot.slane %v3073, %v3086
    %v3088 = vcombine.low %v3080, %v3087
    %v3089 = vcombine.low %v1875, %v1882
    %v3090 = vcombine.low %v1889, %v1896
    %v3092 = vunpack.c.l.s4 1983009808
    %v3093 = vunpack.c.0.s8 %v3092
    %v3094 = vlaneseq
    %v3095 = vshrl.u32 %v3094, 7
    %v3096 = vsub.s32 %v3093, %v3095
    %v3097 = vrot.slane %v3089, %v3096
    %v3099 = vunpack.c.l.s4 1983009808
    %v3100 = vunpack.c.0.s8 %v3099
    %v3101 = vlaneseq
    %v3102 = vshrl.u32 %v3101, 7
    %v3103 = vsub.s32 %v3100, %v3102
    %v3104 = vrot.slane %v3090, %v3103
    %v3105 = vcombine.low %v3097, %v3104
    %v3106 = vcombine.low %v1903, %v1910
    %v3107 = vcombine.low %v1917, %v1924
    %v3109 = vunpack.c.l.s4 1983009808
    %v3110 = vunpack.c.0.s8 %v3109
    %v3111 = vlaneseq
    %v3112 = vshrl.u32 %v3111, 7
    %v3113 = vsub.s32 %v3110, %v3112
    %v3114 = vrot.slane %v3106, %v3113
    %v3116 = vunpack.c.l.s4 1983009808
    %v3117 = vunpack.c.0.s8 %v3116
    %v3118 = vlaneseq
    %v3119 = vshrl.u32 %v3118, 7
    %v3120 = vsub.s32 %v3117, %v3119
    %v3121 = vrot.slane %v3107, %v3120
    %v3122 = vcombine.low %v3114, %v3121
    %v3123 = vcombine.low %v1931, %v1938
    %v3124 = vcombine.low %v1945, %v1952
    %v3126 = vunpack.c.l.s4 1983009808
    %v3127 = vunpack.c.0.s8 %v3126
    %v3128 = vlaneseq
    %v3129 = vshrl.u32 %v3128, 7
    %v3130 = vsub.s32 %v3127, %v3129
    %v3131 = vrot.slane %v3123, %v3130
    %v3133 = vunpack.c.l.s4 1983009808
    %v3134 = vunpack.c.0.s8 %v3133
    %v3135 = vlaneseq
    %v3136 = vshrl.u32 %v3135, 7
    %v3137 = vsub.s32 %v3134, %v3136
    %v3138 = vrot.slane %v3124, %v3137
    %v3139 = vcombine.low %v3131, %v3138
    %v3140 = vcombine.low %v1959, %v1966
    %v3141 = vcombine.low %v1973, %v1980
    %v3143 = vunpack.c.l.s4 1983009808
    %v3144 = vunpack.c.0.s8 %v3143
    %v3145 = vlaneseq
    %v3146 = vshrl.u32 %v3145, 7
    %v3147 = vsub.s32 %v3144, %v3146
    %v3148 = vrot.slane %v3140, %v3147
    %v3150 = vunpack.c.l.s4 1983009808
    %v3151 = vunpack.c.0.s8 %v3150
    %v3152 = vlaneseq
    %v3153 = vshrl.u32 %v3152, 7
    %v3154 = vsub.s32 %v3151, %v3153
    %v3155 = vrot.slane %v3141, %v3154
    %v3156 = vcombine.low %v3148, %v3155
    %v3157 = vcombine.low %v1987, %v1994
    %v3158 = vcombine.low %v2001, %v2008
    %v3160 = vunpack.c.l.s4 1983009808
    %v3161 = vunpack.c.0.s8 %v3160
    %v3162 = vlaneseq
    %v3163 = vshrl.u32 %v3162, 7
    %v3164 = vsub.s32 %v3161, %v3163
    %v3165 = vrot.slane %v3157, %v3164
    %v3167 = vunpack.c.l.s4 1983009808
    %v3168 = vunpack.c.0.s8 %v3167
    %v3169 = vlaneseq
    %v3170 = vshrl.u32 %v3169, 7
    %v3171 = vsub.s32 %v3168, %v3170
    %v3172 = vrot.slane %v3158, %v3171
    %v3173 = vcombine.low %v3165, %v3172
    %v3174 = vcombine.low %v2015, %v2022
    %v3175 = vcombine.low %v2029, %v2036
    %v3177 = vunpack.c.l.s4 1983009808
    %v3178 = vunpack.c.0.s8 %v3177
    %v3179 = vlaneseq
    %v3180 = vshrl.u32 %v3179, 7
    %v3181 = vsub.s32 %v3178, %v3180
    %v3182 = vrot.slane %v3174, %v3181
    %v3184 = vunpack.c.l.s4 1983009808
    %v3185 = vunpack.c.0.s8 %v3184
    %v3186 = vlaneseq
    %v3187 = vshrl.u32 %v3186, 7
    %v3188 = vsub.s32 %v3185, %v3187
    %v3189 = vrot.slane %v3175, %v3188
    %v3190 = vcombine.low %v3182, %v3189
    %v3191 = vcombine.low %v2043, %v2050
    %v3192 = vcombine.low %v2057, %v2064
    %v3194 = vunpack.c.l.s4 1983009808
    %v3195 = vunpack.c.0.s8 %v3194
    %v3196 = vlaneseq
    %v3197 = vshrl.u32 %v3196, 7
    %v3198 = vsub.s32 %v3195, %v3197
    %v3199 = vrot.slane %v3191, %v3198
    %v3201 = vunpack.c.l.s4 1983009808
    %v3202 = vunpack.c.0.s8 %v3201
    %v3203 = vlaneseq
    %v3204 = vshrl.u32 %v3203, 7
    %v3205 = vsub.s32 %v3202, %v3204
    %v3206 = vrot.slane %v3192, %v3205
    %v3207 = vcombine.low %v3199, %v3206
    %v3208 = vcombine.low %v2071, %v2078
    %v3209 = vcombine.low %v2085, %v2092
    %v3211 = vunpack.c.l.s4 1983009808
    %v3212 = vunpack.c.0.s8 %v3211
    %v3213 = vlaneseq
    %v3214 = vshrl.u32 %v3213, 7
    %v3215 = vsub.s32 %v3212, %v3214
    %v3216 = vrot.slane %v3208, %v3215
    %v3218 = vunpack.c.l.s4 1983009808
    %v3219 = vunpack.c.0.s8 %v3218
    %v3220 = vlaneseq
    %v3221 = vshrl.u32 %v3220, 7
    %v3222 = vsub.s32 %v3219, %v3221
    %v3223 = vrot.slane %v3209, %v3222
    %v3224 = vcombine.low %v3216, %v3223
    %v3225 = vcombine.low %v2099, %v2106
    %v3226 = vcombine.low %v2113, %v2120
    %v3228 = vunpack.c.l.s4 1983009808
    %v3229 = vunpack.c.0.s8 %v3228
    %v3230 = vlaneseq
    %v3231 = vshrl.u32 %v3230, 7
    %v3232 = vsub.s32 %v3229, %v3231
    %v3233 = vrot.slane %v3225, %v3232
    %v3235 = vunpack.c.l.s4 1983009808
    %v3236 = vunpack.c.0.s8 %v3235
    %v3237 = vlaneseq
    %v3238 = vshrl.u32 %v3237, 7
    %v3239 = vsub.s32 %v3236, %v3238
    %v3240 = vrot.slane %v3226, %v3239
    %v3241 = vcombine.low %v3233, %v3240
    %v3242 = vcombine.low %v2127, %v2134
    %v3243 = vcombine.low %v2141, %v2148
    %v3245 = vunpack.c.l.s4 1983009808
    %v3246 = vunpack.c.0.s8 %v3245
    %v3247 = vlaneseq
    %v3248 = vshrl.u32 %v3247, 7
    %v3249 = vsub.s32 %v3246, %v3248
    %v3250 = vrot.slane %v3242, %v3249
    %v3252 = vunpack.c.l.s4 1983009808
    %v3253 = vunpack.c.0.s8 %v3252
    %v3254 = vlaneseq
    %v3255 = vshrl.u32 %v3254, 7
    %v3256 = vsub.s32 %v3253, %v3255
    %v3257 = vrot.slane %v3243, %v3256
    %v3258 = vcombine.low %v3250, %v3257
    %v3259 = vcombine.low %v2155, %v2162
    %v3260 = vcombine.low %v2169, %v2176
    %v3262 = vunpack.c.l.s4 1983009808
    %v3263 = vunpack.c.0.s8 %v3262
    %v3264 = vlaneseq
    %v3265 = vshrl.u32 %v3264, 7
    %v3266 = vsub.s32 %v3263, %v3265
    %v3267 = vrot.slane %v3259, %v3266
    %v3269 = vunpack.c.l.s4 1983009808
    %v3270 = vunpack.c.0.s8 %v3269
    %v3271 = vlaneseq
    %v3272 = vshrl.u32 %v3271, 7
    %v3273 = vsub.s32 %v3270, %v3272
    %v3274 = vrot.slane %v3260, %v3273
    %v3275 = vcombine.low %v3267, %v3274
    %v3276 = vcombine.low %v2183, %v2190
    %v3277 = vcombine.low %v2197, %v2204
    %v3279 = vunpack.c.l.s4 1983009808
    %v3280 = vunpack.c.0.s8 %v3279
    %v3281 = vlaneseq
    %v3282 = vshrl.u32 %v3281, 7
    %v3283 = vsub.s32 %v3280, %v3282
    %v3284 = vrot.slane %v3276, %v3283
    %v3286 = vunpack.c.l.s4 1983009808
    %v3287 = vunpack.c.0.s8 %v3286
    %v3288 = vlaneseq
    %v3289 = vshrl.u32 %v3288, 7
    %v3290 = vsub.s32 %v3287, %v3289
    %v3291 = vrot.slane %v3277, %v3290
    %v3292 = vcombine.low %v3284, %v3291
    %3293 = vset.pattern.permute.xlu0 0
    %3294 = vperm.xlu0 %3293, %v2221
    %v3295 = vpop.permute.xlu0 %3294
    %3296 = vset.pattern.permute.xlu0 0
    %3297 = vperm.xlu0 %3296, %v2238
    %v3298 = vpop.permute.xlu0 %3297
    %3299 = vset.pattern.permute.xlu0 0
    %3300 = vperm.xlu0 %3299, %v2255
    %v3301 = vpop.permute.xlu0 %3300
    %3302 = vset.pattern.permute.xlu0 0
    %3303 = vperm.xlu0 %3302, %v2272
    %v3304 = vpop.permute.xlu0 %3303
    %3305 = vset.pattern.permute.xlu0 0
    %3306 = vperm.xlu0 %3305, %v2289
    %v3307 = vpop.permute.xlu0 %3306
    %3308 = vset.pattern.permute.xlu0 0
    %3309 = vperm.xlu0 %3308, %v2306
    %v3310 = vpop.permute.xlu0 %3309
    %3311 = vset.pattern.permute.xlu0 0
    %3312 = vperm.xlu0 %3311, %v2323
    %v3313 = vpop.permute.xlu0 %3312
    %3314 = vset.pattern.permute.xlu0 0
    %3315 = vperm.xlu0 %3314, %v2340
    %v3316 = vpop.permute.xlu0 %3315
    %3317 = vset.pattern.permute.xlu0 0
    %3318 = vperm.xlu0 %3317, %v2357
    %v3319 = vpop.permute.xlu0 %3318
    %3320 = vset.pattern.permute.xlu0 0
    %3321 = vperm.xlu0 %3320, %v2374
    %v3322 = vpop.permute.xlu0 %3321
    %3323 = vset.pattern.permute.xlu0 0
    %3324 = vperm.xlu0 %3323, %v2391
    %v3325 = vpop.permute.xlu0 %3324
    %3326 = vset.pattern.permute.xlu0 0
    %3327 = vperm.xlu0 %3326, %v2408
    %v3328 = vpop.permute.xlu0 %3327
    %3329 = vset.pattern.permute.xlu0 0
    %3330 = vperm.xlu0 %3329, %v2425
    %v3331 = vpop.permute.xlu0 %3330
    %3332 = vset.pattern.permute.xlu0 0
    %3333 = vperm.xlu0 %3332, %v2442
    %v3334 = vpop.permute.xlu0 %3333
    %3335 = vset.pattern.permute.xlu0 0
    %3336 = vperm.xlu0 %3335, %v2459
    %v3337 = vpop.permute.xlu0 %3336
    %3338 = vset.pattern.permute.xlu0 0
    %3339 = vperm.xlu0 %3338, %v2476
    %v3340 = vpop.permute.xlu0 %3339
    %3341 = vset.pattern.permute.xlu0 0
    %3342 = vperm.xlu0 %3341, %v2493
    %v3343 = vpop.permute.xlu0 %3342
    %3344 = vset.pattern.permute.xlu0 0
    %3345 = vperm.xlu0 %3344, %v2510
    %v3346 = vpop.permute.xlu0 %3345
    %3347 = vset.pattern.permute.xlu0 0
    %3348 = vperm.xlu0 %3347, %v2527
    %v3349 = vpop.permute.xlu0 %3348
    %3350 = vset.pattern.permute.xlu0 0
    %3351 = vperm.xlu0 %3350, %v2544
    %v3352 = vpop.permute.xlu0 %3351
    %3353 = vset.pattern.permute.xlu0 0
    %3354 = vperm.xlu0 %3353, %v2561
    %v3355 = vpop.permute.xlu0 %3354
    %3356 = vset.pattern.permute.xlu0 0
    %3357 = vperm.xlu0 %3356, %v2578
    %v3358 = vpop.permute.xlu0 %3357
    %3359 = vset.pattern.permute.xlu0 0
    %3360 = vperm.xlu0 %3359, %v2595
    %v3361 = vpop.permute.xlu0 %3360
    %3362 = vset.pattern.permute.xlu0 0
    %3363 = vperm.xlu0 %3362, %v2612
    %v3364 = vpop.permute.xlu0 %3363
    %3365 = vset.pattern.permute.xlu0 0
    %3366 = vperm.xlu0 %3365, %v2629
    %v3367 = vpop.permute.xlu0 %3366
    %3368 = vset.pattern.permute.xlu0 0
    %3369 = vperm.xlu0 %3368, %v2646
    %v3370 = vpop.permute.xlu0 %3369
    %3371 = vset.pattern.permute.xlu0 0
    %3372 = vperm.xlu0 %3371, %v2663
    %v3373 = vpop.permute.xlu0 %3372
    %3374 = vset.pattern.permute.xlu0 0
    %3375 = vperm.xlu0 %3374, %v2680
    %v3376 = vpop.permute.xlu0 %3375
    %3377 = vset.pattern.permute.xlu0 0
    %3378 = vperm.xlu0 %3377, %v2697
    %v3379 = vpop.permute.xlu0 %3378
    %3380 = vset.pattern.permute.xlu0 0
    %3381 = vperm.xlu0 %3380, %v2714
    %v3382 = vpop.permute.xlu0 %3381
    %3383 = vset.pattern.permute.xlu0 0
    %3384 = vperm.xlu0 %3383, %v2731
    %v3385 = vpop.permute.xlu0 %3384
    %3386 = vset.pattern.permute.xlu0 0
    %3387 = vperm.xlu0 %3386, %v2748
    %v3388 = vpop.permute.xlu0 %3387
    %3389 = vset.pattern.permute.xlu0 0
    %3390 = vperm.xlu0 %3389, %v2765
    %v3391 = vpop.permute.xlu0 %3390
    %3392 = vset.pattern.permute.xlu0 0
    %3393 = vperm.xlu0 %3392, %v2782
    %v3394 = vpop.permute.xlu0 %3393
    %3395 = vset.pattern.permute.xlu0 0
    %3396 = vperm.xlu0 %3395, %v2799
    %v3397 = vpop.permute.xlu0 %3396
    %3398 = vset.pattern.permute.xlu0 0
    %3399 = vperm.xlu0 %3398, %v2816
    %v3400 = vpop.permute.xlu0 %3399
    %3401 = vset.pattern.permute.xlu0 0
    %3402 = vperm.xlu0 %3401, %v2833
    %v3403 = vpop.permute.xlu0 %3402
    %3404 = vset.pattern.permute.xlu0 0
    %3405 = vperm.xlu0 %3404, %v2850
    %v3406 = vpop.permute.xlu0 %3405
    %3407 = vset.pattern.permute.xlu0 0
    %3408 = vperm.xlu0 %3407, %v2867
    %v3409 = vpop.permute.xlu0 %3408
    %3410 = vset.pattern.permute.xlu0 0
    %3411 = vperm.xlu0 %3410, %v2884
    %v3412 = vpop.permute.xlu0 %3411
    %3413 = vset.pattern.permute.xlu0 0
    %3414 = vperm.xlu0 %3413, %v2901
    %v3415 = vpop.permute.xlu0 %3414
    %3416 = vset.pattern.permute.xlu0 0
    %3417 = vperm.xlu0 %3416, %v2918
    %v3418 = vpop.permute.xlu0 %3417
    %3419 = vset.pattern.permute.xlu0 0
    %3420 = vperm.xlu0 %3419, %v2935
    %v3421 = vpop.permute.xlu0 %3420
    %3422 = vset.pattern.permute.xlu0 0
    %3423 = vperm.xlu0 %3422, %v2952
    %v3424 = vpop.permute.xlu0 %3423
    %3425 = vset.pattern.permute.xlu0 0
    %3426 = vperm.xlu0 %3425, %v2969
    %v3427 = vpop.permute.xlu0 %3426
    %3428 = vset.pattern.permute.xlu0 0
    %3429 = vperm.xlu0 %3428, %v2986
    %v3430 = vpop.permute.xlu0 %3429
    %3431 = vset.pattern.permute.xlu0 0
    %3432 = vperm.xlu0 %3431, %v3003
    %v3433 = vpop.permute.xlu0 %3432
    %3434 = vset.pattern.permute.xlu0 0
    %3435 = vperm.xlu0 %3434, %v3020
    %v3436 = vpop.permute.xlu0 %3435
    %3437 = vset.pattern.permute.xlu0 0
    %3438 = vperm.xlu0 %3437, %v3037
    %v3439 = vpop.permute.xlu0 %3438
    %3440 = vset.pattern.permute.xlu0 0
    %3441 = vperm.xlu0 %3440, %v3054
    %v3442 = vpop.permute.xlu0 %3441
    %3443 = vset.pattern.permute.xlu0 0
    %3444 = vperm.xlu0 %3443, %v3071
    %v3445 = vpop.permute.xlu0 %3444
    %3446 = vset.pattern.permute.xlu0 0
    %3447 = vperm.xlu0 %3446, %v3088
    %v3448 = vpop.permute.xlu0 %3447
    %3449 = vset.pattern.permute.xlu0 0
    %3450 = vperm.xlu0 %3449, %v3105
    %v3451 = vpop.permute.xlu0 %3450
    %3452 = vset.pattern.permute.xlu0 0
    %3453 = vperm.xlu0 %3452, %v3122
    %v3454 = vpop.permute.xlu0 %3453
    %3455 = vset.pattern.permute.xlu0 0
    %3456 = vperm.xlu0 %3455, %v3139
    %v3457 = vpop.permute.xlu0 %3456
    %3458 = vset.pattern.permute.xlu0 0
    %3459 = vperm.xlu0 %3458, %v3156
    %v3460 = vpop.permute.xlu0 %3459
    %3461 = vset.pattern.permute.xlu0 0
    %3462 = vperm.xlu0 %3461, %v3173
    %v3463 = vpop.permute.xlu0 %3462
    %3464 = vset.pattern.permute.xlu0 0
    %3465 = vperm.xlu0 %3464, %v3190
    %v3466 = vpop.permute.xlu0 %3465
    %3467 = vset.pattern.permute.xlu0 0
    %3468 = vperm.xlu0 %3467, %v3207
    %v3469 = vpop.permute.xlu0 %3468
    %3470 = vset.pattern.permute.xlu0 0
    %3471 = vperm.xlu0 %3470, %v3224
    %v3472 = vpop.permute.xlu0 %3471
    %3473 = vset.pattern.permute.xlu0 0
    %3474 = vperm.xlu0 %3473, %v3241
    %v3475 = vpop.permute.xlu0 %3474
    %3476 = vset.pattern.permute.xlu0 0
    %3477 = vperm.xlu0 %3476, %v3258
    %v3478 = vpop.permute.xlu0 %3477
    %3479 = vset.pattern.permute.xlu0 0
    %3480 = vperm.xlu0 %3479, %v3275
    %v3481 = vpop.permute.xlu0 %3480
    %3482 = vset.pattern.permute.xlu0 0
    %3483 = vperm.xlu0 %3482, %v3292
    %v3484 = vpop.permute.xlu0 %3483
    %v3485 = vlaneseq
    %v3486 = vand.u32 %v3485, 127
    %v3487 = vlaneseq
    %v3488 = vshrl.u32 %v3487, 7
    %v3489 = vsub.s32 %v3486, %v3488
    %v3490 = vrot.slane %v3295, %v3489
    %v3491 = vadd.s32 %v3486, 4294967288
    %v3492 = vlaneseq
    %v3493 = vshrl.u32 %v3492, 7
    %v3494 = vsub.s32 %v3491, %v3493
    %v3495 = vrot.slane %v3298, %v3494
    %vm3496 = vcmask 130112
    %v3497 = vsel %vm3496, %v3495, %v3490
    %v3498 = vadd.s32 %v3486, 4294967280
    %v3499 = vlaneseq
    %v3500 = vshrl.u32 %v3499, 7
    %v3501 = vsub.s32 %v3498, %v3500
    %v3502 = vrot.slane %v3301, %v3501
    %vm3503 = vcmask 195712
    %v3504 = vsel %vm3503, %v3502, %v3497
    %v3505 = vadd.s32 %v3486, 4294967272
    %v3506 = vlaneseq
    %v3507 = vshrl.u32 %v3506, 7
    %v3508 = vsub.s32 %v3505, %v3507
    %v3509 = vrot.slane %v3304, %v3508
    %vm3510 = vcmask 261312
    %v3511 = vsel %vm3510, %v3509, %v3504
    %v3512 = vadd.s32 %v3486, 4294967264
    %v3513 = vlaneseq
    %v3514 = vshrl.u32 %v3513, 7
    %v3515 = vsub.s32 %v3512, %v3514
    %v3516 = vrot.slane %v3307, %v3515
    %vm3517 = vcmask 326912
    %v3518 = vsel %vm3517, %v3516, %v3511
    %v3519 = vadd.s32 %v3486, 4294967256
    %v3520 = vlaneseq
    %v3521 = vshrl.u32 %v3520, 7
    %v3522 = vsub.s32 %v3519, %v3521
    %v3523 = vrot.slane %v3310, %v3522
    %vm3524 = vcmask 392512
    %v3525 = vsel %vm3524, %v3523, %v3518
    %v3526 = vadd.s32 %v3486, 4294967248
    %v3527 = vlaneseq
    %v3528 = vshrl.u32 %v3527, 7
    %v3529 = vsub.s32 %v3526, %v3528
    %v3530 = vrot.slane %v3313, %v3529
    %vm3531 = vcmask 458112
    %v3532 = vsel %vm3531, %v3530, %v3525
    %v3533 = vadd.s32 %v3486, 4294967240
    %v3534 = vlaneseq
    %v3535 = vshrl.u32 %v3534, 7
    %v3536 = vsub.s32 %v3533, %v3535
    %v3537 = vrot.slane %v3316, %v3536
    %vm3538 = vcmask 523712
    %v3539 = vsel %vm3538, %v3537, %v3532
    %v3540 = vadd.s32 %v3486, 4294967232
    %v3541 = vlaneseq
    %v3542 = vshrl.u32 %v3541, 7
    %v3543 = vsub.s32 %v3540, %v3542
    %v3544 = vrot.slane %v3319, %v3543
    %vm3545 = vcmask 589312
    %v3546 = vsel %vm3545, %v3544, %v3539
    %v3547 = vadd.s32 %v3486, 4294967224
    %v3548 = vlaneseq
    %v3549 = vshrl.u32 %v3548, 7
    %v3550 = vsub.s32 %v3547, %v3549
    %v3551 = vrot.slane %v3322, %v3550
    %vm3552 = vcmask 654912
    %v3553 = vsel %vm3552, %v3551, %v3546
    %v3554 = vadd.s32 %v3486, 4294967216
    %v3555 = vlaneseq
    %v3556 = vshrl.u32 %v3555, 7
    %v3557 = vsub.s32 %v3554, %v3556
    %v3558 = vrot.slane %v3325, %v3557
    %vm3559 = vcmask 720512
    %v3560 = vsel %vm3559, %v3558, %v3553
    %v3561 = vadd.s32 %v3486, 4294967208
    %v3562 = vlaneseq
    %v3563 = vshrl.u32 %v3562, 7
    %v3564 = vsub.s32 %v3561, %v3563
    %v3565 = vrot.slane %v3328, %v3564
    %vm3566 = vcmask 786112
    %v3567 = vsel %vm3566, %v3565, %v3560
    %v3568 = vadd.s32 %v3486, 4294967200
    %v3569 = vlaneseq
    %v3570 = vshrl.u32 %v3569, 7
    %v3571 = vsub.s32 %v3568, %v3570
    %v3572 = vrot.slane %v3331, %v3571
    %vm3573 = vcmask 851712
    %v3574 = vsel %vm3573, %v3572, %v3567
    %v3575 = vadd.s32 %v3486, 4294967192
    %v3576 = vlaneseq
    %v3577 = vshrl.u32 %v3576, 7
    %v3578 = vsub.s32 %v3575, %v3577
    %v3579 = vrot.slane %v3334, %v3578
    %vm3580 = vcmask 917312
    %v3581 = vsel %vm3580, %v3579, %v3574
    %v3582 = vadd.s32 %v3486, 4294967184
    %v3583 = vlaneseq
    %v3584 = vshrl.u32 %v3583, 7
    %v3585 = vsub.s32 %v3582, %v3584
    %v3586 = vrot.slane %v3337, %v3585
    %vm3587 = vcmask 982912
    %v3588 = vsel %vm3587, %v3586, %v3581
    %v3589 = vadd.s32 %v3486, 4294967176
    %v3590 = vlaneseq
    %v3591 = vshrl.u32 %v3590, 7
    %v3592 = vsub.s32 %v3589, %v3591
    %v3593 = vrot.slane %v3340, %v3592
    %vm3594 = vcmask 1048512
    %v3595 = vsel %vm3594, %v3593, %v3588
    %v3596 = vlaneseq
    %v3597 = vshrl.u32 %v3596, 7
    %v3598 = vsub.s32 %v3486, %v3597
    %v3599 = vrot.slane %v3343, %v3598
    %v3600 = vlaneseq
    %v3601 = vshrl.u32 %v3600, 7
    %v3602 = vsub.s32 %v3491, %v3601
    %v3603 = vrot.slane %v3346, %v3602
    %v3604 = vsel %vm3496, %v3603, %v3599
    %v3605 = vlaneseq
    %v3606 = vshrl.u32 %v3605, 7
    %v3607 = vsub.s32 %v3498, %v3606
    %v3608 = vrot.slane %v3349, %v3607
    %v3609 = vsel %vm3503, %v3608, %v3604
    %v3610 = vlaneseq
    %v3611 = vshrl.u32 %v3610, 7
    %v3612 = vsub.s32 %v3505, %v3611
    %v3613 = vrot.slane %v3352, %v3612
    %v3614 = vsel %vm3510, %v3613, %v3609
    %v3615 = vlaneseq
    %v3616 = vshrl.u32 %v3615, 7
    %v3617 = vsub.s32 %v3512, %v3616
    %v3618 = vrot.slane %v3355, %v3617
    %v3619 = vsel %vm3517, %v3618, %v3614
    %v3620 = vlaneseq
    %v3621 = vshrl.u32 %v3620, 7
    %v3622 = vsub.s32 %v3519, %v3621
    %v3623 = vrot.slane %v3358, %v3622
    %v3624 = vsel %vm3524, %v3623, %v3619
    %v3625 = vlaneseq
    %v3626 = vshrl.u32 %v3625, 7
    %v3627 = vsub.s32 %v3526, %v3626
    %v3628 = vrot.slane %v3361, %v3627
    %v3629 = vsel %vm3531, %v3628, %v3624
    %v3630 = vlaneseq
    %v3631 = vshrl.u32 %v3630, 7
    %v3632 = vsub.s32 %v3533, %v3631
    %v3633 = vrot.slane %v3364, %v3632
    %v3634 = vsel %vm3538, %v3633, %v3629
    %v3635 = vlaneseq
    %v3636 = vshrl.u32 %v3635, 7
    %v3637 = vsub.s32 %v3540, %v3636
    %v3638 = vrot.slane %v3367, %v3637
    %v3639 = vsel %vm3545, %v3638, %v3634
    %v3640 = vlaneseq
    %v3641 = vshrl.u32 %v3640, 7
    %v3642 = vsub.s32 %v3547, %v3641
    %v3643 = vrot.slane %v3370, %v3642
    %v3644 = vsel %vm3552, %v3643, %v3639
    %v3645 = vlaneseq
    %v3646 = vshrl.u32 %v3645, 7
    %v3647 = vsub.s32 %v3554, %v3646
    %v3648 = vrot.slane %v3373, %v3647
    %v3649 = vsel %vm3559, %v3648, %v3644
    %v3650 = vlaneseq
    %v3651 = vshrl.u32 %v3650, 7
    %v3652 = vsub.s32 %v3561, %v3651
    %v3653 = vrot.slane %v3376, %v3652
    %v3654 = vsel %vm3566, %v3653, %v3649
    %v3655 = vlaneseq
    %v3656 = vshrl.u32 %v3655, 7
    %v3657 = vsub.s32 %v3568, %v3656
    %v3658 = vrot.slane %v3379, %v3657
    %v3659 = vsel %vm3573, %v3658, %v3654
    %v3660 = vlaneseq
    %v3661 = vshrl.u32 %v3660, 7
    %v3662 = vsub.s32 %v3575, %v3661
    %v3663 = vrot.slane %v3382, %v3662
    %v3664 = vsel %vm3580, %v3663, %v3659
    %v3665 = vlaneseq
    %v3666 = vshrl.u32 %v3665, 7
    %v3667 = vsub.s32 %v3582, %v3666
    %v3668 = vrot.slane %v3385, %v3667
    %v3669 = vsel %vm3587, %v3668, %v3664
    %v3670 = vlaneseq
    %v3671 = vshrl.u32 %v3670, 7
    %v3672 = vsub.s32 %v3589, %v3671
    %v3673 = vrot.slane %v3388, %v3672
    %v3674 = vsel %vm3594, %v3673, %v3669
    %v3675 = vlaneseq
    %v3676 = vshrl.u32 %v3675, 7
    %v3677 = vsub.s32 %v3486, %v3676
    %v3678 = vrot.slane %v3391, %v3677
    %v3679 = vlaneseq
    %v3680 = vshrl.u32 %v3679, 7
    %v3681 = vsub.s32 %v3491, %v3680
    %v3682 = vrot.slane %v3394, %v3681
    %v3683 = vsel %vm3496, %v3682, %v3678
    %v3684 = vlaneseq
    %v3685 = vshrl.u32 %v3684, 7
    %v3686 = vsub.s32 %v3498, %v3685
    %v3687 = vrot.slane %v3397, %v3686
    %v3688 = vsel %vm3503, %v3687, %v3683
    %v3689 = vlaneseq
    %v3690 = vshrl.u32 %v3689, 7
    %v3691 = vsub.s32 %v3505, %v3690
    %v3692 = vrot.slane %v3400, %v3691
    %v3693 = vsel %vm3510, %v3692, %v3688
    %v3694 = vlaneseq
    %v3695 = vshrl.u32 %v3694, 7
    %v3696 = vsub.s32 %v3512, %v3695
    %v3697 = vrot.slane %v3403, %v3696
    %v3698 = vsel %vm3517, %v3697, %v3693
    %v3699 = vlaneseq
    %v3700 = vshrl.u32 %v3699, 7
    %v3701 = vsub.s32 %v3519, %v3700
    %v3702 = vrot.slane %v3406, %v3701
    %v3703 = vsel %vm3524, %v3702, %v3698
    %v3704 = vlaneseq
    %v3705 = vshrl.u32 %v3704, 7
    %v3706 = vsub.s32 %v3526, %v3705
    %v3707 = vrot.slane %v3409, %v3706
    %v3708 = vsel %vm3531, %v3707, %v3703
    %v3709 = vlaneseq
    %v3710 = vshrl.u32 %v3709, 7
    %v3711 = vsub.s32 %v3533, %v3710
    %v3712 = vrot.slane %v3412, %v3711
    %v3713 = vsel %vm3538, %v3712, %v3708
    %v3714 = vlaneseq
    %v3715 = vshrl.u32 %v3714, 7
    %v3716 = vsub.s32 %v3540, %v3715
    %v3717 = vrot.slane %v3415, %v3716
    %v3718 = vsel %vm3545, %v3717, %v3713
    %v3719 = vlaneseq
    %v3720 = vshrl.u32 %v3719, 7
    %v3721 = vsub.s32 %v3547, %v3720
    %v3722 = vrot.slane %v3418, %v3721
    %v3723 = vsel %vm3552, %v3722, %v3718
    %v3724 = vlaneseq
    %v3725 = vshrl.u32 %v3724, 7
    %v3726 = vsub.s32 %v3554, %v3725
    %v3727 = vrot.slane %v3421, %v3726
    %v3728 = vsel %vm3559, %v3727, %v3723
    %v3729 = vlaneseq
    %v3730 = vshrl.u32 %v3729, 7
    %v3731 = vsub.s32 %v3561, %v3730
    %v3732 = vrot.slane %v3424, %v3731
    %v3733 = vsel %vm3566, %v3732, %v3728
    %v3734 = vlaneseq
    %v3735 = vshrl.u32 %v3734, 7
    %v3736 = vsub.s32 %v3568, %v3735
    %v3737 = vrot.slane %v3427, %v3736
    %v3738 = vsel %vm3573, %v3737, %v3733
    %v3739 = vlaneseq
    %v3740 = vshrl.u32 %v3739, 7
    %v3741 = vsub.s32 %v3575, %v3740
    %v3742 = vrot.slane %v3430, %v3741
    %v3743 = vsel %vm3580, %v3742, %v3738
    %v3744 = vlaneseq
    %v3745 = vshrl.u32 %v3744, 7
    %v3746 = vsub.s32 %v3582, %v3745
    %v3747 = vrot.slane %v3433, %v3746
    %v3748 = vsel %vm3587, %v3747, %v3743
    %v3749 = vlaneseq
    %v3750 = vshrl.u32 %v3749, 7
    %v3751 = vsub.s32 %v3589, %v3750
    %v3752 = vrot.slane %v3436, %v3751
    %v3753 = vsel %vm3594, %v3752, %v3748
    %v3754 = vlaneseq
    %v3755 = vshrl.u32 %v3754, 7
    %v3756 = vsub.s32 %v3486, %v3755
    %v3757 = vrot.slane %v3439, %v3756
    %v3758 = vlaneseq
    %v3759 = vshrl.u32 %v3758, 7
    %v3760 = vsub.s32 %v3491, %v3759
    %v3761 = vrot.slane %v3442, %v3760
    %v3762 = vsel %vm3496, %v3761, %v3757
    %v3763 = vlaneseq
    %v3764 = vshrl.u32 %v3763, 7
    %v3765 = vsub.s32 %v3498, %v3764
    %v3766 = vrot.slane %v3445, %v3765
    %v3767 = vsel %vm3503, %v3766, %v3762
    %v3768 = vlaneseq
    %v3769 = vshrl.u32 %v3768, 7
    %v3770 = vsub.s32 %v3505, %v3769
    %v3771 = vrot.slane %v3448, %v3770
    %v3772 = vsel %vm3510, %v3771, %v3767
    %v3773 = vlaneseq
    %v3774 = vshrl.u32 %v3773, 7
    %v3775 = vsub.s32 %v3512, %v3774
    %v3776 = vrot.slane %v3451, %v3775
    %v3777 = vsel %vm3517, %v3776, %v3772
    %v3778 = vlaneseq
    %v3779 = vshrl.u32 %v3778, 7
    %v3780 = vsub.s32 %v3519, %v3779
    %v3781 = vrot.slane %v3454, %v3780
    %v3782 = vsel %vm3524, %v3781, %v3777
    %v3783 = vlaneseq
    %v3784 = vshrl.u32 %v3783, 7
    %v3785 = vsub.s32 %v3526, %v3784
    %v3786 = vrot.slane %v3457, %v3785
    %v3787 = vsel %vm3531, %v3786, %v3782
    %v3788 = vlaneseq
    %v3789 = vshrl.u32 %v3788, 7
    %v3790 = vsub.s32 %v3533, %v3789
    %v3791 = vrot.slane %v3460, %v3790
    %v3792 = vsel %vm3538, %v3791, %v3787
    %v3793 = vlaneseq
    %v3794 = vshrl.u32 %v3793, 7
    %v3795 = vsub.s32 %v3540, %v3794
    %v3796 = vrot.slane %v3463, %v3795
    %v3797 = vsel %vm3545, %v3796, %v3792
    %v3798 = vlaneseq
    %v3799 = vshrl.u32 %v3798, 7
    %v3800 = vsub.s32 %v3547, %v3799
    %v3801 = vrot.slane %v3466, %v3800
    %v3802 = vsel %vm3552, %v3801, %v3797
    %v3803 = vlaneseq
    %v3804 = vshrl.u32 %v3803, 7
    %v3805 = vsub.s32 %v3554, %v3804
    %v3806 = vrot.slane %v3469, %v3805
    %v3807 = vsel %vm3559, %v3806, %v3802
    %v3808 = vlaneseq
    %v3809 = vshrl.u32 %v3808, 7
    %v3810 = vsub.s32 %v3561, %v3809
    %v3811 = vrot.slane %v3472, %v3810
    %v3812 = vsel %vm3566, %v3811, %v3807
    %v3813 = vlaneseq
    %v3814 = vshrl.u32 %v3813, 7
    %v3815 = vsub.s32 %v3568, %v3814
    %v3816 = vrot.slane %v3475, %v3815
    %v3817 = vsel %vm3573, %v3816, %v3812
    %v3818 = vlaneseq
    %v3819 = vshrl.u32 %v3818, 7
    %v3820 = vsub.s32 %v3575, %v3819
    %v3821 = vrot.slane %v3478, %v3820
    %v3822 = vsel %vm3580, %v3821, %v3817
    %v3823 = vlaneseq
    %v3824 = vshrl.u32 %v3823, 7
    %v3825 = vsub.s32 %v3582, %v3824
    %v3826 = vrot.slane %v3481, %v3825
    %v3827 = vsel %vm3587, %v3826, %v3822
    %v3828 = vlaneseq
    %v3829 = vshrl.u32 %v3828, 7
    %v3830 = vsub.s32 %v3589, %v3829
    %v3831 = vrot.slane %v3484, %v3830
    %v3832 = vsel %vm3594, %v3831, %v3827
    %vm3833 = vcmask 1041409
    %v3834 = vsel %vm3833, %v3753, %v3595
    %v3835 = vsel %vm3833, %v3832, %v3674
    %v3836 = vcombine.low %v3834, %v3835
    %v3838 = vunpack.c.l.s4 1983009808
    %v3839 = vunpack.c.0.s8 %v3838
    %v3840 = vlaneseq
    %v3841 = vshrl.u32 %v3840, 7
    %v3842 = vsub.s32 %v3839, %v3841
    %v3843 = vrot.slane %v3836, %v3842
    %v3845 = vadd.f32 %v28, %v3843
    %3846 = vst [vmem:[#allocation5] sm:$0xf] %v3845
    // Predicated region
    $region14: #{tpu_custom_call.1} parent=1 // pred_check
      %p3847 = pneg %p23
    $region15: #{tpu_custom_call.1} parent=1 // pred_check_branch
      %3849 = sbr.rel (%p3847) target = $region17
    $region16: #{tpu_custom_call.1} parent=1 // pred_region
      %v3850 = vld [vmem:[#allocation5] sm:$0xf]
      %v3851 = vmul.f32 %v3850, 0.00390625
      %3852 = vst [vmem:[#allocation5] sm:$0xf] %v3851
    $region17: #{tpu_custom_call.1} parent=1 // pred_fallthru
      _
    // Predicated region
    $region18: #{tpu_custom_call.1} parent=1 // pred_check
      _
    $region19: #{tpu_custom_call.1} parent=1 // pred_check_branch
      %3854 = sbr.rel (0) target = $region21
    $region20: #{tpu_custom_call.1} parent=1 // pred_region
      %s3856 = ssub.s32 64, 64
      %3857 = vsyncadd [#allocation4], %s3856
      %s3859 = sshll.u32 [#allocation5], 4
      %s3860 = int_to_ptr.vmem [resolvable:$true] %s3859
      %3862 = dma.vmem_to_hbm [thread:$0]  %s3860, 64, %s1, [#allocation4]
    $region21: #{tpu_custom_call.1} parent=1 // pred_fallthru
      _
    // Predicated region
    $region22: #{tpu_custom_call.1} parent=1 // pred_check
      _
    $region23: #{tpu_custom_call.1} parent=1 // pred_check_branch
      %3864 = sbr.rel (0) target = $region25
    $region24: #{tpu_custom_call.1} parent=1 // pred_region
      %3865 = dma.done [#allocation4], 64
    $region25: #{tpu_custom_call.1} parent=1 // pred_fallthru
      _
    %3866 = vsyncpa [#allocation3], 1
    %3867 = vsyncpa [#allocation4], 1

</llo_original>
